<compile_context>
chip_gen: v5e
topology: v5e:2x2
jax: 0.10.0
libtpu: 0.0.40
codegen_flags: <defaults>
</compile_context>

<pallas_src>
import jax
import jax.numpy as jnp
from jax.experimental import pallas as pl
from jax.experimental.pallas import tpu as pltpu

NUM_CLASSES = 10
LANES = 128


# ---------------------------------------------------------------------------
# Fused LeNet kernel
# ---------------------------------------------------------------------------
def _lenet_kernel(x_ref, w1t_ref, b1_ref, s1e_ref, s1o_ref, r1e_ref, r1o_ref,
                  w2t_ref, b2_ref, s2e_ref, s2o_ref, r2e_ref, r2o_ref,
                  fc1w_ref, fc1b_ref, fc2w_ref, fc2b_ref, fc3w_ref, fc3b_ref,
                  out_ref):
    f32 = jnp.float32
    B = x_ref.shape[0]

    def mm(a, b):
        return jnp.dot(a, b, preferred_element_type=f32)

    # ---- conv1 (1->6, k=5, pad=2 pre-applied) as ONE MXU matmul ------------
    # im2col along H only: E1[b, i, ki*32 + w] = x[b, i+ki, w]; the W-direction
    # taps are folded into the banded weight matrix w1t built in the wrapper.
    x = x_ref[...]                                              # (B, 32, 32)
    e1 = jnp.concatenate([x[:, ki:ki + 28, :] for ki in range(5)], axis=-1)
    e1 = e1.reshape(B * 28, 5 * 32)                             # (B*28, 160)
    y1 = jnp.maximum(mm(e1, w1t_ref[...]) + b1_ref[...], 0.0)   # (B*28, 6*28)

    # ---- pool1: 2x2/2 max-pool via batched exact 0/1 selection matmuls -----
    wp1 = jnp.maximum(mm(y1, s1e_ref[...]), mm(y1, s1o_ref[...]))    # (B*28, 6*14)
    p1 = jnp.maximum(mm(r1e_ref[...], wp1), mm(r1o_ref[...], wp1))   # (B*14, 6*14)
    p1 = p1.reshape(B, 14, 6 * 14)

    # ---- conv2 (6->16, k=5, valid) as ONE MXU matmul ------------------------
    # E2[b, i, ki*84 + ic*14 + w] = pool1[b, ic, i+ki, w]
    e2 = jnp.concatenate([p1[:, ki:ki + 10, :] for ki in range(5)], axis=-1)
    e2 = e2.reshape(B * 10, 5 * 6 * 14)                         # (B*10, 420)
    y2 = jnp.maximum(mm(e2, w2t_ref[...]) + b2_ref[...], 0.0)   # (B*10, 16*10)

    # ---- pool2 --------------------------------------------------------------
    wp2 = jnp.maximum(mm(y2, s2e_ref[...]), mm(y2, s2o_ref[...]))    # (B*10, 16*5)
    p2 = jnp.maximum(mm(r2e_ref[...], wp2), mm(r2o_ref[...], wp2))   # (B*5, 16*5)
    p2 = p2.reshape(B, 5, 16 * 5)

    # ---- flatten (torch (c,y,x) order folded into fc1 packing) + FC stack ---
    feat = jnp.concatenate([p2[:, y, :] for y in range(5)], axis=-1)  # (B, 400)
    a1 = jnp.maximum(mm(feat, fc1w_ref[...]) + fc1b_ref[...], 0.0)    # (B, 128)
    a2 = jnp.maximum(mm(a1, fc2w_ref[...]) + fc2b_ref[...], 0.0)      # (B, 128)
    logits = mm(a2, fc3w_ref[...]) + fc3b_ref[...]                    # (B, 128)

    # ---- masked log-softmax over lanes; single lane-dense (B, 128) store ----
    lane = jax.lax.broadcasted_iota(jnp.int32, logits.shape, 1)
    logits = jnp.where(lane < NUM_CLASSES, logits, -1e30)
    m = jnp.max(logits, axis=-1, keepdims=True)
    s = logits - m
    lse = jnp.log(jnp.sum(jnp.exp(s), axis=-1, keepdims=True))
    out_ref[...] = (s - lse).astype(out_ref.dtype)


# ---------------------------------------------------------------------------
# Wrapper-side packing helpers (one-time, pure XLA on tiny tensors)
# ---------------------------------------------------------------------------
def _wpool_sel(C, W, parity):
    """(C*W, C*(W//2)) 0/1 selection: [c*W + j, c*(W//2) + r] = (j == 2r+parity)."""
    Wo = W // 2
    row = jnp.arange(C * W)
    col = jnp.arange(C * Wo)
    rc, rj = row // W, row % W
    cc, cr = col // Wo, col % Wo
    m = (rc[:, None] == cc[None, :]) & (rj[:, None] == (2 * cr + parity)[None, :])
    return m.astype(jnp.float32)


def _hpool_sel(B, H, parity):
    """(B*(H//2), B*H) row-pair selection (transpose of _wpool_sel)."""
    return _wpool_sel(B, H, parity).T


def _conv_toeplitz(w, in_w, out_w):
    """Fold a conv's W-direction taps into a banded matmul operand.

    w: (OC, IC, KH, KW) -> (KH*IC*in_w, OC*out_w) with
    M[ki*IC*in_w + ic*in_w + wc, oc*out_w + j] = w[oc, ic, ki, wc - j]
    when 0 <= wc - j < KW, else 0.
    """
    OC, IC, KH, KW = w.shape
    wc = jnp.arange(in_w)[:, None]
    j = jnp.arange(out_w)[None, :]
    kj = wc - j
    valid = (kj >= 0) & (kj < KW)
    kjc = jnp.clip(kj, 0, KW - 1)
    blk = jnp.where(valid[None, None, None], w[:, :, :, kjc], 0.0)  # (OC,IC,KH,in_w,out_w)
    return blk.transpose(2, 1, 3, 0, 4).reshape(KH * IC * in_w, OC * out_w)


def pack_params(p):
    """One-time repack of torch-layout parameters into kernel layouts."""
    # conv weights folded into banded "Toeplitz" matmul operands
    w1t = _conv_toeplitz(p["conv1_w"], in_w=32, out_w=28)      # (160, 168)
    w2t = _conv_toeplitz(p["conv2_w"], in_w=14, out_w=10)      # (420, 160)
    b1r = jnp.repeat(p["conv1_b"], 28)[None, :]                # (1, 168)
    b2r = jnp.repeat(p["conv2_b"], 10)[None, :]                # (1, 160)
    # fc1: torch flatten index c*25 + y*5 + x  ->  kernel layout y*80 + c*5 + x
    fc1 = p["fc1_w"].reshape(16, 5, 5, 120).transpose(1, 0, 2, 3).reshape(400, 120)
    return {
        "w1t": w1t, "b1r": b1r,
        "s1e": _wpool_sel(6, 28, 0), "s1o": _wpool_sel(6, 28, 1),
        "w2t": w2t, "b2r": b2r,
        "s2e": _wpool_sel(16, 10, 0), "s2o": _wpool_sel(16, 10, 1),
        "fc1_w": jnp.pad(fc1, ((0, 0), (0, LANES - 120))),
        "fc1_b": jnp.pad(p["fc1_b"], ((0, 0), (0, LANES - 120))),
        "fc2_w": jnp.pad(p["fc2_w"], ((0, LANES - 120), (0, LANES - 84))),
        "fc2_b": jnp.pad(p["fc2_b"], ((0, 0), (0, LANES - 84))),
        "fc3_w": jnp.pad(p["fc3_w"], ((0, LANES - 84), (0, LANES - NUM_CLASSES))),
        "fc3_b": jnp.pad(p["fc3_b"], ((0, 0), (0, LANES - NUM_CLASSES))),
    }


# ---------------------------------------------------------------------------
# Forward wrapper
# ---------------------------------------------------------------------------
def lenet_forward(packed, x):
    """x: (B, 1, 28, 28) f32 NCHW -> (B, 10) log-probabilities."""
    B = x.shape[0]
    # conv1 padding=2 applied on the raw input (one cheap XLA op)
    xp = jnp.pad(x, ((0, 0), (0, 0), (2, 2), (2, 2))).reshape(B, 32, 32)

    # H-direction pooling selectors depend on B (row-pair max over (b, i) rows)
    r1e, r1o = _hpool_sel(B, 28, 0), _hpool_sel(B, 28, 1)      # (B*14, B*28)
    r2e, r2o = _hpool_sel(B, 10, 0), _hpool_sel(B, 10, 1)      # (B*5,  B*10)

    vmem = pl.BlockSpec(memory_space=pltpu.MemorySpace.VMEM)

    flops = 2 * (
        (B * 28) * 160 * 168                       # conv1 matmul
        + 2 * (B * 28) * 168 * 84                  # pool1 W-stage
        + 2 * (B * 14) * (B * 28) * 84             # pool1 H-stage
        + (B * 10) * 420 * 160                     # conv2 matmul
        + 2 * (B * 10) * 160 * 80                  # pool2 W-stage
        + 2 * (B * 5) * (B * 10) * 80              # pool2 H-stage
        + B * 400 * 128 + 2 * B * 128 * 128)       # fc1/fc2/fc3
    bytes_accessed = 4 * (
        B * 32 * 32 + 160 * 168 + 168 + 2 * 168 * 84 + 2 * (B * 14) * (B * 28)
        + 420 * 160 + 160 + 2 * 160 * 80 + 2 * (B * 5) * (B * 10)
        + 400 * 128 + 128 + 2 * (128 * 128 + 128) + B * 128)

    out = pl.pallas_call(
        _lenet_kernel,
        out_shape=jax.ShapeDtypeStruct((B, LANES), jnp.float32),
        in_specs=[vmem] * 19,
        out_specs=vmem,
        cost_estimate=pl.CostEstimate(flops=flops, transcendentals=B * LANES,
                                      bytes_accessed=bytes_accessed),
    )(xp, packed["w1t"], packed["b1r"], packed["s1e"], packed["s1o"], r1e, r1o,
      packed["w2t"], packed["b2r"], packed["s2e"], packed["s2o"], r2e, r2o,
      packed["fc1_w"], packed["fc1_b"], packed["fc2_w"], packed["fc2_b"],
      packed["fc3_w"], packed["fc3_b"])
    return out[:, :NUM_CLASSES]


# ---------------------------------------------------------------------------
# Params + pure-JAX reference (exact PyTorch LeNet semantics)
# ---------------------------------------------------------------------------
def init_params(key):
    ks = jax.random.split(key, 10)
    f32 = jnp.float32
    s = 0.1
    return {
        "conv1_w": s * jax.random.normal(ks[0], (6, 1, 5, 5), f32),
        "conv1_b": s * jax.random.normal(ks[1], (6,), f32),
        "conv2_w": s * jax.random.normal(ks[2], (16, 6, 5, 5), f32),
        "conv2_b": s * jax.random.normal(ks[3], (16,), f32),
        # FC weights stored pre-transposed as (in, out); bias as (1, out).
        "fc1_w": s * jax.random.normal(ks[4], (400, 120), f32),
        "fc1_b": s * jax.random.normal(ks[5], (1, 120), f32),
        "fc2_w": s * jax.random.normal(ks[6], (120, 84), f32),
        "fc2_b": s * jax.random.normal(ks[7], (1, 84), f32),
        "fc3_w": s * jax.random.normal(ks[8], (84, 10), f32),
        "fc3_b": s * jax.random.normal(ks[9], (1, 10), f32),
    }


def lenet_reference(params, x):
    hi = jax.lax.Precision.HIGHEST
    y = jax.lax.conv_general_dilated(
        x, params["conv1_w"], window_strides=(1, 1), padding=((2, 2), (2, 2)),
        dimension_numbers=("NCHW", "OIHW", "NCHW"), precision=hi)
    y = jax.nn.relu(y + params["conv1_b"].reshape(1, 6, 1, 1))
    y = jax.lax.reduce_window(y, -jnp.inf, jax.lax.max,
                              (1, 1, 2, 2), (1, 1, 2, 2), "VALID")
    y = jax.lax.conv_general_dilated(
        y, params["conv2_w"], window_strides=(1, 1), padding="VALID",
        dimension_numbers=("NCHW", "OIHW", "NCHW"), precision=hi)
    y = jax.nn.relu(y + params["conv2_b"].reshape(1, 16, 1, 1))
    y = jax.lax.reduce_window(y, -jnp.inf, jax.lax.max,
                              (1, 1, 2, 2), (1, 1, 2, 2), "VALID")
    y = y.reshape(y.shape[0], -1)
    y = jax.nn.relu(jnp.dot(y, params["fc1_w"], precision=hi) + params["fc1_b"])
    y = jax.nn.relu(jnp.dot(y, params["fc2_w"], precision=hi) + params["fc2_b"])
    y = jnp.dot(y, params["fc3_w"], precision=hi) + params["fc3_b"]
    return jax.nn.log_softmax(y, axis=-1)


if __name__ == "__main__":
    key = jax.random.PRNGKey(0)
    pkey, xkey = jax.random.split(key)
    params = init_params(pkey)
    packed = pack_params(params)
    # MNIST-style input implied by fc1's 16*5*5 = 400 features: (B, 1, 28, 28)
    x = jax.random.normal(xkey, (2, 1, 28, 28), jnp.float32)

    out = jax.jit(lenet_forward)(packed, x)
    out = jax.block_until_ready(out)

    assert out.shape == (2, NUM_CLASSES) and out.dtype == jnp.float32
    # log_softmax rows must (approximately) exp-sum to 1
    assert bool(jnp.allclose(jnp.sum(jnp.exp(out), axis=1), 1.0, atol=1e-4))
    # end-to-end check against a pure-JAX reference of the PyTorch module
    ref = lenet_reference(params, x)
    max_err = float(jnp.max(jnp.abs(out - ref)))
    assert max_err < 2e-2, f"kernel/reference mismatch: max |diff| = {max_err}"
    print("KERNEL_OK")
</pallas_src>

<mosaic_0001>
module attributes {stable_mosaic.version = 11 : i64} {
  func.func @_lenet_kernel(%arg0: memref<2x32x32xf32, #tpu.memory_space<vmem>>, %arg1: memref<160x168xf32, #tpu.memory_space<vmem>>, %arg2: memref<1x168xf32, #tpu.memory_space<vmem>>, %arg3: memref<168x84xf32, #tpu.memory_space<vmem>>, %arg4: memref<168x84xf32, #tpu.memory_space<vmem>>, %arg5: memref<28x56xf32, #tpu.memory_space<vmem>>, %arg6: memref<28x56xf32, #tpu.memory_space<vmem>>, %arg7: memref<420x160xf32, #tpu.memory_space<vmem>>, %arg8: memref<1x160xf32, #tpu.memory_space<vmem>>, %arg9: memref<160x80xf32, #tpu.memory_space<vmem>>, %arg10: memref<160x80xf32, #tpu.memory_space<vmem>>, %arg11: memref<10x20xf32, #tpu.memory_space<vmem>>, %arg12: memref<10x20xf32, #tpu.memory_space<vmem>>, %arg13: memref<400x128xf32, #tpu.memory_space<vmem>>, %arg14: memref<1x128xf32, #tpu.memory_space<vmem>>, %arg15: memref<128x128xf32, #tpu.memory_space<vmem>>, %arg16: memref<1x128xf32, #tpu.memory_space<vmem>>, %arg17: memref<128x128xf32, #tpu.memory_space<vmem>>, %arg18: memref<1x128xf32, #tpu.memory_space<vmem>>, %arg19: memref<2x128xf32, #tpu.memory_space<vmem>>) attributes {dimension_semantics = [], scalar_prefetch = 0 : i64, scratch_operands = 0 : i64, tpu.core_type = #tpu.core_type<tc>} {
    %c0 = arith.constant 0 : index
    %c0_0 = arith.constant 0 : index
    %c0_1 = arith.constant 0 : index
    %0 = vector.load %arg0[%c0, %c0_0, %c0_1] : memref<2x32x32xf32, #tpu.memory_space<vmem>>, vector<2x32x32xf32>
    %1 = vector.extract_strided_slice %0 {offsets = [0, 0, 0], sizes = [2, 28, 32], strides = [1, 1, 1]} : vector<2x32x32xf32> to vector<2x28x32xf32>
    %2 = vector.extract_strided_slice %0 {offsets = [0, 1, 0], sizes = [2, 28, 32], strides = [1, 1, 1]} : vector<2x32x32xf32> to vector<2x28x32xf32>
    %3 = vector.extract_strided_slice %0 {offsets = [0, 2, 0], sizes = [2, 28, 32], strides = [1, 1, 1]} : vector<2x32x32xf32> to vector<2x28x32xf32>
    %4 = vector.extract_strided_slice %0 {offsets = [0, 3, 0], sizes = [2, 28, 32], strides = [1, 1, 1]} : vector<2x32x32xf32> to vector<2x28x32xf32>
    %5 = vector.extract_strided_slice %0 {offsets = [0, 4, 0], sizes = [2, 28, 32], strides = [1, 1, 1]} : vector<2x32x32xf32> to vector<2x28x32xf32>
    %6 = tpu.concatenate %1, %2, %3, %4, %5 in 2 : vector<2x28x32xf32>, vector<2x28x32xf32>, vector<2x28x32xf32>, vector<2x28x32xf32>, vector<2x28x32xf32> -> vector<2x28x160xf32>
    %7 = vector.shape_cast %6 : vector<2x28x160xf32> to vector<56x160xf32>
    %c0_2 = arith.constant 0 : index
    %c0_3 = arith.constant 0 : index
    %8 = vector.load %arg1[%c0_2, %c0_3] : memref<160x168xf32, #tpu.memory_space<vmem>>, vector<160x168xf32>
    %cst = arith.constant dense<0.000000e+00> : vector<56x168xf32>
    %9 = tpu.matmul %7, %8, %cst {dimension_numbers = #tpu.dot_dimension_numbers<[1], [0], [0], [1], [0, 0, 1, 1], [], []>} : vector<56x160xf32>, vector<160x168xf32>, vector<56x168xf32> -> vector<56x168xf32>
    %c0_4 = arith.constant 0 : index
    %c0_5 = arith.constant 0 : index
    %10 = vector.load %arg2[%c0_4, %c0_5] : memref<1x168xf32, #tpu.memory_space<vmem>>, vector<1x168xf32>
    %11 = vector.broadcast %10 : vector<1x168xf32> to vector<56x168xf32>
    %12 = arith.addf %9, %11 : vector<56x168xf32>
    %cst_6 = arith.constant 0.000000e+00 : f32
    %13 = vector.broadcast %cst_6 : f32 to vector<56x168xf32>
    %14 = arith.maximumf %12, %13 : vector<56x168xf32>
    %c0_7 = arith.constant 0 : index
    %c0_8 = arith.constant 0 : index
    %15 = vector.load %arg3[%c0_7, %c0_8] : memref<168x84xf32, #tpu.memory_space<vmem>>, vector<168x84xf32>
    %cst_9 = arith.constant dense<0.000000e+00> : vector<56x84xf32>
    %16 = tpu.matmul %14, %15, %cst_9 {dimension_numbers = #tpu.dot_dimension_numbers<[1], [0], [0], [1], [0, 0, 1, 1], [], []>} : vector<56x168xf32>, vector<168x84xf32>, vector<56x84xf32> -> vector<56x84xf32>
    %c0_10 = arith.constant 0 : index
    %c0_11 = arith.constant 0 : index
    %17 = vector.load %arg4[%c0_10, %c0_11] : memref<168x84xf32, #tpu.memory_space<vmem>>, vector<168x84xf32>
    %cst_12 = arith.constant dense<0.000000e+00> : vector<56x84xf32>
    %18 = tpu.matmul %14, %17, %cst_12 {dimension_numbers = #tpu.dot_dimension_numbers<[1], [0], [0], [1], [0, 0, 1, 1], [], []>} : vector<56x168xf32>, vector<168x84xf32>, vector<56x84xf32> -> vector<56x84xf32>
    %19 = arith.maximumf %16, %18 : vector<56x84xf32>
    %c0_13 = arith.constant 0 : index
    %c0_14 = arith.constant 0 : index
    %20 = vector.load %arg5[%c0_13, %c0_14] : memref<28x56xf32, #tpu.memory_space<vmem>>, vector<28x56xf32>
    %cst_15 = arith.constant dense<0.000000e+00> : vector<28x84xf32>
    %21 = tpu.matmul %20, %19, %cst_15 {dimension_numbers = #tpu.dot_dimension_numbers<[1], [0], [0], [1], [0, 0, 1, 1], [], []>} : vector<28x56xf32>, vector<56x84xf32>, vector<28x84xf32> -> vector<28x84xf32>
    %c0_16 = arith.constant 0 : index
    %c0_17 = arith.constant 0 : index
    %22 = vector.load %arg6[%c0_16, %c0_17] : memref<28x56xf32, #tpu.memory_space<vmem>>, vector<28x56xf32>
    %cst_18 = arith.constant dense<0.000000e+00> : vector<28x84xf32>
    %23 = tpu.matmul %22, %19, %cst_18 {dimension_numbers = #tpu.dot_dimension_numbers<[1], [0], [0], [1], [0, 0, 1, 1], [], []>} : vector<28x56xf32>, vector<56x84xf32>, vector<28x84xf32> -> vector<28x84xf32>
    %24 = arith.maximumf %21, %23 : vector<28x84xf32>
    %25 = vector.shape_cast %24 : vector<28x84xf32> to vector<2x14x84xf32>
    %26 = vector.extract_strided_slice %25 {offsets = [0, 0, 0], sizes = [2, 10, 84], strides = [1, 1, 1]} : vector<2x14x84xf32> to vector<2x10x84xf32>
    %27 = vector.extract_strided_slice %25 {offsets = [0, 1, 0], sizes = [2, 10, 84], strides = [1, 1, 1]} : vector<2x14x84xf32> to vector<2x10x84xf32>
    %28 = vector.extract_strided_slice %25 {offsets = [0, 2, 0], sizes = [2, 10, 84], strides = [1, 1, 1]} : vector<2x14x84xf32> to vector<2x10x84xf32>
    %29 = vector.extract_strided_slice %25 {offsets = [0, 3, 0], sizes = [2, 10, 84], strides = [1, 1, 1]} : vector<2x14x84xf32> to vector<2x10x84xf32>
    %30 = vector.extract_strided_slice %25 {offsets = [0, 4, 0], sizes = [2, 10, 84], strides = [1, 1, 1]} : vector<2x14x84xf32> to vector<2x10x84xf32>
    %31 = tpu.concatenate %26, %27, %28, %29, %30 in 2 : vector<2x10x84xf32>, vector<2x10x84xf32>, vector<2x10x84xf32>, vector<2x10x84xf32>, vector<2x10x84xf32> -> vector<2x10x420xf32>
    %32 = vector.shape_cast %31 : vector<2x10x420xf32> to vector<20x420xf32>
    %c0_19 = arith.constant 0 : index
    %c0_20 = arith.constant 0 : index
    %33 = vector.load %arg7[%c0_19, %c0_20] : memref<420x160xf32, #tpu.memory_space<vmem>>, vector<420x160xf32>
    %cst_21 = arith.constant dense<0.000000e+00> : vector<20x160xf32>
    %34 = tpu.matmul %32, %33, %cst_21 {dimension_numbers = #tpu.dot_dimension_numbers<[1], [0], [0], [1], [0, 0, 1, 1], [], []>} : vector<20x420xf32>, vector<420x160xf32>, vector<20x160xf32> -> vector<20x160xf32>
    %c0_22 = arith.constant 0 : index
    %c0_23 = arith.constant 0 : index
    %35 = vector.load %arg8[%c0_22, %c0_23] : memref<1x160xf32, #tpu.memory_space<vmem>>, vector<1x160xf32>
    %36 = vector.broadcast %35 : vector<1x160xf32> to vector<20x160xf32>
    %37 = arith.addf %34, %36 : vector<20x160xf32>
    %cst_24 = arith.constant 0.000000e+00 : f32
    %38 = vector.broadcast %cst_24 : f32 to vector<20x160xf32>
    %39 = arith.maximumf %37, %38 : vector<20x160xf32>
    %c0_25 = arith.constant 0 : index
    %c0_26 = arith.constant 0 : index
    %40 = vector.load %arg9[%c0_25, %c0_26] : memref<160x80xf32, #tpu.memory_space<vmem>>, vector<160x80xf32>
    %cst_27 = arith.constant dense<0.000000e+00> : vector<20x80xf32>
    %41 = tpu.matmul %39, %40, %cst_27 {dimension_numbers = #tpu.dot_dimension_numbers<[1], [0], [0], [1], [0, 0, 1, 1], [], []>} : vector<20x160xf32>, vector<160x80xf32>, vector<20x80xf32> -> vector<20x80xf32>
    %c0_28 = arith.constant 0 : index
    %c0_29 = arith.constant 0 : index
    %42 = vector.load %arg10[%c0_28, %c0_29] : memref<160x80xf32, #tpu.memory_space<vmem>>, vector<160x80xf32>
    %cst_30 = arith.constant dense<0.000000e+00> : vector<20x80xf32>
    %43 = tpu.matmul %39, %42, %cst_30 {dimension_numbers = #tpu.dot_dimension_numbers<[1], [0], [0], [1], [0, 0, 1, 1], [], []>} : vector<20x160xf32>, vector<160x80xf32>, vector<20x80xf32> -> vector<20x80xf32>
    %44 = arith.maximumf %41, %43 : vector<20x80xf32>
    %c0_31 = arith.constant 0 : index
    %c0_32 = arith.constant 0 : index
    %45 = vector.load %arg11[%c0_31, %c0_32] : memref<10x20xf32, #tpu.memory_space<vmem>>, vector<10x20xf32>
    %cst_33 = arith.constant dense<0.000000e+00> : vector<10x80xf32>
    %46 = tpu.matmul %45, %44, %cst_33 {dimension_numbers = #tpu.dot_dimension_numbers<[1], [0], [0], [1], [0, 0, 1, 1], [], []>} : vector<10x20xf32>, vector<20x80xf32>, vector<10x80xf32> -> vector<10x80xf32>
    %c0_34 = arith.constant 0 : index
    %c0_35 = arith.constant 0 : index
    %47 = vector.load %arg12[%c0_34, %c0_35] : memref<10x20xf32, #tpu.memory_space<vmem>>, vector<10x20xf32>
    %cst_36 = arith.constant dense<0.000000e+00> : vector<10x80xf32>
    %48 = tpu.matmul %47, %44, %cst_36 {dimension_numbers = #tpu.dot_dimension_numbers<[1], [0], [0], [1], [0, 0, 1, 1], [], []>} : vector<10x20xf32>, vector<20x80xf32>, vector<10x80xf32> -> vector<10x80xf32>
    %49 = arith.maximumf %46, %48 : vector<10x80xf32>
    %50 = vector.shape_cast %49 : vector<10x80xf32> to vector<2x5x80xf32>
    %51 = vector.extract_strided_slice %50 {offsets = [0, 0, 0], sizes = [2, 1, 80], strides = [1, 1, 1]} : vector<2x5x80xf32> to vector<2x1x80xf32>
    %52 = vector.shape_cast %51 : vector<2x1x80xf32> to vector<2x80xf32>
    %53 = vector.extract_strided_slice %50 {offsets = [0, 1, 0], sizes = [2, 1, 80], strides = [1, 1, 1]} : vector<2x5x80xf32> to vector<2x1x80xf32>
    %54 = vector.shape_cast %53 : vector<2x1x80xf32> to vector<2x80xf32>
    %55 = vector.extract_strided_slice %50 {offsets = [0, 2, 0], sizes = [2, 1, 80], strides = [1, 1, 1]} : vector<2x5x80xf32> to vector<2x1x80xf32>
    %56 = vector.shape_cast %55 : vector<2x1x80xf32> to vector<2x80xf32>
    %57 = vector.extract_strided_slice %50 {offsets = [0, 3, 0], sizes = [2, 1, 80], strides = [1, 1, 1]} : vector<2x5x80xf32> to vector<2x1x80xf32>
    %58 = vector.shape_cast %57 : vector<2x1x80xf32> to vector<2x80xf32>
    %59 = vector.extract_strided_slice %50 {offsets = [0, 4, 0], sizes = [2, 1, 80], strides = [1, 1, 1]} : vector<2x5x80xf32> to vector<2x1x80xf32>
    %60 = vector.shape_cast %59 : vector<2x1x80xf32> to vector<2x80xf32>
    %61 = tpu.concatenate %52, %54, %56, %58, %60 in 1 : vector<2x80xf32>, vector<2x80xf32>, vector<2x80xf32>, vector<2x80xf32>, vector<2x80xf32> -> vector<2x400xf32>
    %c0_37 = arith.constant 0 : index
    %c0_38 = arith.constant 0 : index
    %62 = vector.load %arg13[%c0_37, %c0_38] : memref<400x128xf32, #tpu.memory_space<vmem>>, vector<400x128xf32>
    %cst_39 = arith.constant dense<0.000000e+00> : vector<2x128xf32>
    %63 = tpu.matmul %61, %62, %cst_39 {dimension_numbers = #tpu.dot_dimension_numbers<[1], [0], [0], [1], [0, 0, 1, 1], [], []>} : vector<2x400xf32>, vector<400x128xf32>, vector<2x128xf32> -> vector<2x128xf32>
    %c0_40 = arith.constant 0 : index
    %c0_41 = arith.constant 0 : index
    %64 = vector.load %arg14[%c0_40, %c0_41] : memref<1x128xf32, #tpu.memory_space<vmem>>, vector<1x128xf32>
    %65 = vector.broadcast %64 : vector<1x128xf32> to vector<2x128xf32>
    %66 = arith.addf %63, %65 : vector<2x128xf32>
    %cst_42 = arith.constant 0.000000e+00 : f32
    %67 = vector.broadcast %cst_42 : f32 to vector<2x128xf32>
    %68 = arith.maximumf %66, %67 : vector<2x128xf32>
    %c0_43 = arith.constant 0 : index
    %c0_44 = arith.constant 0 : index
    %69 = vector.load %arg15[%c0_43, %c0_44] : memref<128x128xf32, #tpu.memory_space<vmem>>, vector<128x128xf32>
    %cst_45 = arith.constant dense<0.000000e+00> : vector<2x128xf32>
    %70 = tpu.matmul %68, %69, %cst_45 {dimension_numbers = #tpu.dot_dimension_numbers<[1], [0], [0], [1], [0, 0, 1, 1], [], []>} : vector<2x128xf32>, vector<128x128xf32>, vector<2x128xf32> -> vector<2x128xf32>
    %c0_46 = arith.constant 0 : index
    %c0_47 = arith.constant 0 : index
    %71 = vector.load %arg16[%c0_46, %c0_47] : memref<1x128xf32, #tpu.memory_space<vmem>>, vector<1x128xf32>
    %72 = vector.broadcast %71 : vector<1x128xf32> to vector<2x128xf32>
    %73 = arith.addf %70, %72 : vector<2x128xf32>
    %cst_48 = arith.constant 0.000000e+00 : f32
    %74 = vector.broadcast %cst_48 : f32 to vector<2x128xf32>
    %75 = arith.maximumf %73, %74 : vector<2x128xf32>
    %c0_49 = arith.constant 0 : index
    %c0_50 = arith.constant 0 : index
    %76 = vector.load %arg17[%c0_49, %c0_50] : memref<128x128xf32, #tpu.memory_space<vmem>>, vector<128x128xf32>
    %cst_51 = arith.constant dense<0.000000e+00> : vector<2x128xf32>
    %77 = tpu.matmul %75, %76, %cst_51 {dimension_numbers = #tpu.dot_dimension_numbers<[1], [0], [0], [1], [0, 0, 1, 1], [], []>} : vector<2x128xf32>, vector<128x128xf32>, vector<2x128xf32> -> vector<2x128xf32>
    %c0_52 = arith.constant 0 : index
    %c0_53 = arith.constant 0 : index
    %78 = vector.load %arg18[%c0_52, %c0_53] : memref<1x128xf32, #tpu.memory_space<vmem>>, vector<1x128xf32>
    %79 = vector.broadcast %78 : vector<1x128xf32> to vector<2x128xf32>
    %80 = arith.addf %77, %79 : vector<2x128xf32>
    %81 = tpu.iota {dimensions = array<i32: 1>} : vector<2x128xi32>
    %c10_i32 = arith.constant 10 : i32
    %82 = vector.broadcast %c10_i32 : i32 to vector<2x128xi32>
    %83 = arith.cmpi slt, %81, %82 : vector<2x128xi32>
    %cst_54 = arith.constant -1.000000e+30 : f32
    %84 = vector.broadcast %cst_54 : f32 to vector<2x128xf32>
    %85 = arith.select %83, %80, %84 : vector<2x128xi1>, vector<2x128xf32>
    %cst_55 = arith.constant dense<0xFF800000> : vector<2xf32>
    %86 = vector.multi_reduction <maximumf>, %85, %cst_55 [1] : vector<2x128xf32> to vector<2xf32>
    %87 = vector.shape_cast %86 : vector<2xf32> to vector<2x1xf32>
    %88 = vector.broadcast %87 : vector<2x1xf32> to vector<2x128xf32>
    %89 = arith.subf %85, %88 : vector<2x128xf32>
    %90 = math.exp %89 : vector<2x128xf32>
    %cst_56 = arith.constant dense<0.000000e+00> : vector<2xf32>
    %91 = vector.multi_reduction <add>, %90, %cst_56 [1] : vector<2x128xf32> to vector<2xf32>
    %92 = vector.shape_cast %91 : vector<2xf32> to vector<2x1xf32>
    %93 = math.log %92 : vector<2x1xf32>
    %94 = vector.broadcast %93 : vector<2x1xf32> to vector<2x128xf32>
    %95 = arith.subf %89, %94 : vector<2x128xf32>
    %c0_57 = arith.constant 0 : index
    %c0_58 = arith.constant 0 : index
    %96 = vector.load %arg19[%c0_57, %c0_58] : memref<2x128xf32, #tpu.memory_space<vmem>>, vector<2x128xf32>
    tpu.vector_store %arg19[%c0_57, %c0_58], %95 {strides = array<i32>} : memref<2x128xf32, #tpu.memory_space<vmem>>, vector<2x128xf32>,
    return
  }
}

</mosaic_0001>

<llo_original>
// kernel: lenet_forward.1
$region0: #{lenet_forward.1}
  #allocation0 [shape = 'u32[]', space=smem, size = 0x4, offset = 0x4, fixed_abs, tag = 'smem constant byte address 0x4 - core index']
  #allocation1 [shape = 'u32[72,128]{1,0:T(1,128)}', space=vmem, size = 0x9000, scoped, tag = 'internal scratch']
  %s0 = inlined_call_operand.vmem [shape: f32[2,32,32], index: 0, kind: input, shape index: {}]
  %s1 = inlined_call_operand.vmem [shape: f32[160,168], index: 1, kind: input, shape index: {}]
  %s2 = inlined_call_operand.vmem [shape: f32[1,168], index: 2, kind: input, shape index: {}]
  %s3 = inlined_call_operand.vmem [shape: f32[168,84], index: 3, kind: input, shape index: {}]
  %s4 = inlined_call_operand.vmem [shape: f32[168,84], index: 4, kind: input, shape index: {}]
  %s5 = inlined_call_operand.vmem [shape: f32[28,56], index: 5, kind: input, shape index: {}]
  %s6 = inlined_call_operand.vmem [shape: f32[28,56], index: 6, kind: input, shape index: {}]
  %s7 = inlined_call_operand.vmem [shape: f32[420,160], index: 7, kind: input, shape index: {}]
  %s8 = inlined_call_operand.vmem [shape: f32[1,160], index: 8, kind: input, shape index: {}]
  %s9 = inlined_call_operand.vmem [shape: f32[160,80], index: 9, kind: input, shape index: {}]
  %s10 = inlined_call_operand.vmem [shape: f32[160,80], index: 10, kind: input, shape index: {}]
  %s11 = inlined_call_operand.vmem [shape: f32[10,20], index: 11, kind: input, shape index: {}]
  %s12 = inlined_call_operand.vmem [shape: f32[10,20], index: 12, kind: input, shape index: {}]
  %s13 = inlined_call_operand.vmem [shape: f32[400,128], index: 13, kind: input, shape index: {}]
  %s14 = inlined_call_operand.vmem [shape: f32[1,128], index: 14, kind: input, shape index: {}]
  %s15 = inlined_call_operand.vmem [shape: f32[128,128], index: 15, kind: input, shape index: {}]
  %s16 = inlined_call_operand.vmem [shape: f32[1,128], index: 16, kind: input, shape index: {}]
  %s17 = inlined_call_operand.vmem [shape: f32[128,128], index: 17, kind: input, shape index: {}]
  %s18 = inlined_call_operand.vmem [shape: f32[1,128], index: 18, kind: input, shape index: {}]
  %s19 = inlined_call_operand.hbm [shape: f32[2,128], index: 19, kind: output, shape index: {}]
  %s20 = sld [smem:[#allocation0]]
  $region86: #{lenet_forward.1} parent=0
    _
  %s22 = ssub.s32 1, %s20
  %s23 = scalar_select 0, %s22, %s20
  $region1: #{lenet_forward.1} parent=0
    #allocation2 [shape = 'u8[1024]{0}', space=vmem, size = 0x400, scoped, tag = 'output window, operand 0, single buffered']
    #allocation3 [shape = 's32[1]{0}', space=sflag, size = 0x4, scoped, tag = 'scoped memory for lenet_forward.1']
    %24 = vsyncpa [#allocation3], 0
    // Predicated region
    $region2: #{lenet_forward.1} parent=1 // pred_check
      _
    $region3: #{lenet_forward.1} parent=1 // pred_check_branch
      %26 = sbr.rel (0) target = $region5
    $region4: #{lenet_forward.1} parent=1 // pred_region
      _
    $region5: #{lenet_forward.1} parent=1 // pred_fallthru
      _
    // Predicated region
    $region6: #{lenet_forward.1} parent=1 // pred_check
      _
    $region7: #{lenet_forward.1} parent=1 // pred_check_branch
      %28 = sbr.rel (0) target = $region9
    $region8: #{lenet_forward.1} parent=1 // pred_region
      _
    $region9: #{lenet_forward.1} parent=1 // pred_fallthru
      _
    // Predicated region
    $region10: #{lenet_forward.1} parent=1 // pred_check
      _
    $region11: #{lenet_forward.1} parent=1 // pred_check_branch
      %30 = sbr.rel (0) target = $region13
    $region12: #{lenet_forward.1} parent=1 // pred_region
      _
    $region13: #{lenet_forward.1} parent=1 // pred_fallthru
      _
    // Predicated region
    $region14: #{lenet_forward.1} parent=1 // pred_check
      _
    $region15: #{lenet_forward.1} parent=1 // pred_check_branch
      %32 = sbr.rel (0) target = $region17
    $region16: #{lenet_forward.1} parent=1 // pred_region
      _
    $region17: #{lenet_forward.1} parent=1 // pred_fallthru
      _
    // Predicated region
    $region18: #{lenet_forward.1} parent=1 // pred_check
      _
    $region19: #{lenet_forward.1} parent=1 // pred_check_branch
      %34 = sbr.rel (0) target = $region21
    $region20: #{lenet_forward.1} parent=1 // pred_region
      _
    $region21: #{lenet_forward.1} parent=1 // pred_fallthru
      _
    // Predicated region
    $region22: #{lenet_forward.1} parent=1 // pred_check
      _
    $region23: #{lenet_forward.1} parent=1 // pred_check_branch
      %36 = sbr.rel (0) target = $region25
    $region24: #{lenet_forward.1} parent=1 // pred_region
      _
    $region25: #{lenet_forward.1} parent=1 // pred_fallthru
      _
    // Predicated region
    $region26: #{lenet_forward.1} parent=1 // pred_check
      _
    $region27: #{lenet_forward.1} parent=1 // pred_check_branch
      %38 = sbr.rel (0) target = $region29
    $region28: #{lenet_forward.1} parent=1 // pred_region
      _
    $region29: #{lenet_forward.1} parent=1 // pred_fallthru
      _
    // Predicated region
    $region30: #{lenet_forward.1} parent=1 // pred_check
      _
    $region31: #{lenet_forward.1} parent=1 // pred_check_branch
      %40 = sbr.rel (0) target = $region33
    $region32: #{lenet_forward.1} parent=1 // pred_region
      _
    $region33: #{lenet_forward.1} parent=1 // pred_fallthru
      _
    // Predicated region
    $region34: #{lenet_forward.1} parent=1 // pred_check
      _
    $region35: #{lenet_forward.1} parent=1 // pred_check_branch
      %42 = sbr.rel (0) target = $region37
    $region36: #{lenet_forward.1} parent=1 // pred_region
      _
    $region37: #{lenet_forward.1} parent=1 // pred_fallthru
      _
    // Predicated region
    $region38: #{lenet_forward.1} parent=1 // pred_check
      _
    $region39: #{lenet_forward.1} parent=1 // pred_check_branch
      %44 = sbr.rel (0) target = $region41
    $region40: #{lenet_forward.1} parent=1 // pred_region
      _
    $region41: #{lenet_forward.1} parent=1 // pred_fallthru
      _
    // Predicated region
    $region42: #{lenet_forward.1} parent=1 // pred_check
      _
    $region43: #{lenet_forward.1} parent=1 // pred_check_branch
      %46 = sbr.rel (0) target = $region45
    $region44: #{lenet_forward.1} parent=1 // pred_region
      _
    $region45: #{lenet_forward.1} parent=1 // pred_fallthru
      _
    // Predicated region
    $region46: #{lenet_forward.1} parent=1 // pred_check
      _
    $region47: #{lenet_forward.1} parent=1 // pred_check_branch
      %48 = sbr.rel (0) target = $region49
    $region48: #{lenet_forward.1} parent=1 // pred_region
      _
    $region49: #{lenet_forward.1} parent=1 // pred_fallthru
      _
    // Predicated region
    $region50: #{lenet_forward.1} parent=1 // pred_check
      _
    $region51: #{lenet_forward.1} parent=1 // pred_check_branch
      %50 = sbr.rel (0) target = $region53
    $region52: #{lenet_forward.1} parent=1 // pred_region
      _
    $region53: #{lenet_forward.1} parent=1 // pred_fallthru
      _
    // Predicated region
    $region54: #{lenet_forward.1} parent=1 // pred_check
      _
    $region55: #{lenet_forward.1} parent=1 // pred_check_branch
      %52 = sbr.rel (0) target = $region57
    $region56: #{lenet_forward.1} parent=1 // pred_region
      _
    $region57: #{lenet_forward.1} parent=1 // pred_fallthru
      _
    // Predicated region
    $region58: #{lenet_forward.1} parent=1 // pred_check
      _
    $region59: #{lenet_forward.1} parent=1 // pred_check_branch
      %54 = sbr.rel (0) target = $region61
    $region60: #{lenet_forward.1} parent=1 // pred_region
      _
    $region61: #{lenet_forward.1} parent=1 // pred_fallthru
      _
    // Predicated region
    $region62: #{lenet_forward.1} parent=1 // pred_check
      _
    $region63: #{lenet_forward.1} parent=1 // pred_check_branch
      %56 = sbr.rel (0) target = $region65
    $region64: #{lenet_forward.1} parent=1 // pred_region
      _
    $region65: #{lenet_forward.1} parent=1 // pred_fallthru
      _
    // Predicated region
    $region66: #{lenet_forward.1} parent=1 // pred_check
      _
    $region67: #{lenet_forward.1} parent=1 // pred_check_branch
      %58 = sbr.rel (0) target = $region69
    $region68: #{lenet_forward.1} parent=1 // pred_region
      _
    $region69: #{lenet_forward.1} parent=1 // pred_fallthru
      _
    // Predicated region
    $region70: #{lenet_forward.1} parent=1 // pred_check
      _
    $region71: #{lenet_forward.1} parent=1 // pred_check_branch
      %60 = sbr.rel (0) target = $region73
    $region72: #{lenet_forward.1} parent=1 // pred_region
      _
    $region73: #{lenet_forward.1} parent=1 // pred_fallthru
      _
    // Predicated region
    $region74: #{lenet_forward.1} parent=1 // pred_check
      _
    $region75: #{lenet_forward.1} parent=1 // pred_check_branch
      %62 = sbr.rel (0) target = $region77
    $region76: #{lenet_forward.1} parent=1 // pred_region
      _
    $region77: #{lenet_forward.1} parent=1 // pred_fallthru
      _
    %v63 = vld [vmem:[%s0] sm:$0xff]
    %v64 = vld [vmem:[%s0 + $0x8] sm:$0xff]
    %v65 = vld [vmem:[%s0 + $0x10] sm:$0xff]
    %v66 = vld [vmem:[%s0 + $0x18] sm:$0xff]
    %v67 = vld [vmem:[%s0 + $0x20] sm:$0xff]
    %v68 = vld [vmem:[%s0 + $0x28] sm:$0xff]
    %v69 = vld [vmem:[%s0 + $0x30] sm:$0xff]
    %v70 = vld [vmem:[%s0 + $0x38] sm:$0xff]
    %vm79 = vcmask 1046528
    %v80 = vrot.slane %v63, 1
    %v81 = vrot.slane %v64, 1
    %v82 = vsel %vm79, %v80, %v81
    %v83 = vrot.slane %v65, 1
    %v84 = vsel %vm79, %v81, %v83
    %v85 = vrot.slane %v66, 1
    %v86 = vsel %vm79, %v83, %v85
    %v87 = vrot.slane %v67, 1
    %v88 = vrot.slane %v68, 1
    %v89 = vsel %vm79, %v87, %v88
    %v90 = vrot.slane %v69, 1
    %v91 = vsel %vm79, %v88, %v90
    %v92 = vrot.slane %v70, 1
    %v93 = vsel %vm79, %v90, %v92
    %94 = vrot.lane.b32.xlu0 %v82, 32
    %v95 = vpop.permute.xlu0 %94
    %96 = vrot.lane.b32.xlu0 %v84, 32
    %v97 = vpop.permute.xlu0 %96
    %98 = vrot.lane.b32.xlu0 %v86, 32
    %v99 = vpop.permute.xlu0 %98
    %100 = vrot.lane.b32.xlu0 %v85, 32
    %v101 = vpop.permute.xlu0 %100
    %102 = vrot.lane.b32.xlu0 %v89, 32
    %v103 = vpop.permute.xlu0 %102
    %104 = vrot.lane.b32.xlu0 %v91, 32
    %v105 = vpop.permute.xlu0 %104
    %106 = vrot.lane.b32.xlu0 %v93, 32
    %v107 = vpop.permute.xlu0 %106
    %108 = vrot.lane.b32.xlu0 %v92, 32
    %v109 = vpop.permute.xlu0 %108
    %vm118 = vcmask 1045504
    %v119 = vrot.slane %v63, 2
    %v120 = vrot.slane %v64, 2
    %v121 = vsel %vm118, %v119, %v120
    %v122 = vrot.slane %v65, 2
    %v123 = vsel %vm118, %v120, %v122
    %v124 = vrot.slane %v66, 2
    %v125 = vsel %vm118, %v122, %v124
    %v126 = vrot.slane %v67, 2
    %v127 = vrot.slane %v68, 2
    %v128 = vsel %vm118, %v126, %v127
    %v129 = vrot.slane %v69, 2
    %v130 = vsel %vm118, %v127, %v129
    %v131 = vrot.slane %v70, 2
    %v132 = vsel %vm118, %v129, %v131
    %133 = vrot.lane.b32.xlu0 %v121, 64
    %v134 = vpop.permute.xlu0 %133
    %135 = vrot.lane.b32.xlu0 %v123, 64
    %v136 = vpop.permute.xlu0 %135
    %137 = vrot.lane.b32.xlu0 %v125, 64
    %v138 = vpop.permute.xlu0 %137
    %139 = vrot.lane.b32.xlu0 %v124, 64
    %v140 = vpop.permute.xlu0 %139
    %141 = vrot.lane.b32.xlu0 %v128, 64
    %v142 = vpop.permute.xlu0 %141
    %143 = vrot.lane.b32.xlu0 %v130, 64
    %v144 = vpop.permute.xlu0 %143
    %145 = vrot.lane.b32.xlu0 %v132, 64
    %v146 = vpop.permute.xlu0 %145
    %147 = vrot.lane.b32.xlu0 %v131, 64
    %v148 = vpop.permute.xlu0 %147
    %vm157 = vcmask 1044480
    %v158 = vrot.slane %v63, 3
    %v159 = vrot.slane %v64, 3
    %v160 = vsel %vm157, %v158, %v159
    %v161 = vrot.slane %v65, 3
    %v162 = vsel %vm157, %v159, %v161
    %v163 = vrot.slane %v66, 3
    %v164 = vsel %vm157, %v161, %v163
    %v165 = vrot.slane %v67, 3
    %v166 = vrot.slane %v68, 3
    %v167 = vsel %vm157, %v165, %v166
    %v168 = vrot.slane %v69, 3
    %v169 = vsel %vm157, %v166, %v168
    %v170 = vrot.slane %v70, 3
    %v171 = vsel %vm157, %v168, %v170
    %172 = vrot.lane.b32.xlu0 %v160, 96
    %v173 = vpop.permute.xlu0 %172
    %174 = vrot.lane.b32.xlu0 %v162, 96
    %v175 = vpop.permute.xlu0 %174
    %176 = vrot.lane.b32.xlu0 %v164, 96
    %v177 = vpop.permute.xlu0 %176
    %178 = vrot.lane.b32.xlu0 %v163, 96
    %v179 = vpop.permute.xlu0 %178
    %180 = vrot.lane.b32.xlu0 %v167, 96
    %v181 = vpop.permute.xlu0 %180
    %182 = vrot.lane.b32.xlu0 %v169, 96
    %v183 = vpop.permute.xlu0 %182
    %184 = vrot.lane.b32.xlu0 %v171, 96
    %v185 = vpop.permute.xlu0 %184
    %186 = vrot.lane.b32.xlu0 %v170, 96
    %v187 = vpop.permute.xlu0 %186
    %vm196 = vcmask 1043456
    %v197 = vrot.slane %v63, 4
    %v198 = vrot.slane %v64, 4
    %v199 = vsel %vm196, %v197, %v198
    %v200 = vrot.slane %v65, 4
    %v201 = vsel %vm196, %v198, %v200
    %v202 = vrot.slane %v66, 4
    %v203 = vsel %vm196, %v200, %v202
    %v204 = vrot.slane %v67, 4
    %v205 = vrot.slane %v68, 4
    %v206 = vsel %vm196, %v204, %v205
    %v207 = vrot.slane %v69, 4
    %v208 = vsel %vm196, %v205, %v207
    %v209 = vrot.slane %v70, 4
    %v210 = vsel %vm196, %v207, %v209
    %vm211 = vcmask 261120
    %v212 = vsel %vm211, %v63, %v95
    %v213 = vsel %vm211, %v64, %v97
    %v214 = vsel %vm211, %v65, %v99
    %v215 = vsel %vm211, %v66, %v101
    %v216 = vsel %vm211, %v67, %v103
    %v217 = vsel %vm211, %v68, %v105
    %v218 = vsel %vm211, %v69, %v107
    %v219 = vsel %vm211, %v70, %v109
    %vm220 = vcmask 523264
    %v221 = vsel %vm220, %v212, %v134
    %v222 = vsel %vm220, %v213, %v136
    %v223 = vsel %vm220, %v214, %v138
    %v224 = vsel %vm220, %v215, %v140
    %v225 = vsel %vm220, %v216, %v142
    %v226 = vsel %vm220, %v217, %v144
    %v227 = vsel %vm220, %v218, %v146
    %v228 = vsel %vm220, %v219, %v148
    %vm229 = vcmask 785408
    %v230 = vsel %vm229, %v221, %v173
    %v231 = vsel %vm229, %v222, %v175
    %v232 = vsel %vm229, %v223, %v177
    %v233 = vsel %vm229, %v224, %v179
    %v234 = vsel %vm229, %v225, %v181
    %v235 = vsel %vm229, %v226, %v183
    %v236 = vsel %vm229, %v227, %v185
    %v237 = vsel %vm229, %v228, %v187
    %v246 = vrot.slane %v199, 4
    %v247 = vrot.slane %v201, 4
    %v248 = vrot.slane %v203, 4
    %v249 = vrot.slane %v202, 4
    %v250 = vrot.slane %v206, 4
    %v251 = vrot.slane %v208, 4
    %v252 = vrot.slane %v210, 4
    %v253 = vrot.slane %v209, 4
    %v254 = vsel %vm196, %v230, %v246
    %v255 = vsel %vm196, %v246, %v230
    %v256 = vrot.slane %v255, 4
    %v257 = vsel %vm196, %v231, %v247
    %v258 = vsel %vm196, %v247, %v231
    %v259 = vrot.slane %v258, 4
    %v260 = vsel %vm196, %v232, %v248
    %v261 = vsel %vm196, %v248, %v232
    %v262 = vrot.slane %v261, 4
    %v263 = vsel %vm196, %v233, %v249
    %v264 = vsel %vm196, %v234, %v250
    %v265 = vsel %vm196, %v250, %v234
    %v266 = vrot.slane %v265, 4
    %v267 = vsel %vm196, %v235, %v251
    %v268 = vsel %vm196, %v251, %v235
    %v269 = vrot.slane %v268, 4
    %v270 = vsel %vm196, %v236, %v252
    %v271 = vsel %vm196, %v252, %v236
    %v272 = vrot.slane %v271, 4
    %v273 = vsel %vm196, %v237, %v253
    %v274 = vld [vmem:[%s1] sm:$0xff]
    %v275 = vld [vmem:[%s1 + $0x8] sm:$0xff]
    %v276 = vld [vmem:[%s1 + $0x10] sm:$0xff]
    %v277 = vld [vmem:[%s1 + $0x18] sm:$0xff]
    %v278 = vld [vmem:[%s1 + $0x20] sm:$0xff]
    %v279 = vld [vmem:[%s1 + $0x28] sm:$0xff]
    %v280 = vld [vmem:[%s1 + $0x30] sm:$0xff]
    %v281 = vld [vmem:[%s1 + $0x38] sm:$0xff]
    %v282 = vld [vmem:[%s1 + $0x40] sm:$0xff]
    %v283 = vld [vmem:[%s1 + $0x48] sm:$0xff]
    %v284 = vld [vmem:[%s1 + $0x50] sm:$0xff]
    %v285 = vld [vmem:[%s1 + $0x58] sm:$0xff]
    %v286 = vld [vmem:[%s1 + $0x60] sm:$0xff]
    %v287 = vld [vmem:[%s1 + $0x68] sm:$0xff]
    %v288 = vld [vmem:[%s1 + $0x70] sm:$0xff]
    %v289 = vld [vmem:[%s1 + $0x78] sm:$0xff]
    %v290 = vld [vmem:[%s1 + $0x80] sm:$0xff]
    %v291 = vld [vmem:[%s1 + $0x88] sm:$0xff]
    %v292 = vld [vmem:[%s1 + $0x90] sm:$0xff]
    %v293 = vld [vmem:[%s1 + $0x98] sm:$0xff]
    %v294 = vld [vmem:[%s1 + $0xa0] sm:$0xff]
    %v295 = vld [vmem:[%s1 + $0xa8] sm:$0xff]
    %v296 = vld [vmem:[%s1 + $0xb0] sm:$0xff]
    %v297 = vld [vmem:[%s1 + $0xb8] sm:$0xff]
    %v298 = vld [vmem:[%s1 + $0xc0] sm:$0xff]
    %v299 = vld [vmem:[%s1 + $0xc8] sm:$0xff]
    %v300 = vld [vmem:[%s1 + $0xd0] sm:$0xff]
    %v301 = vld [vmem:[%s1 + $0xd8] sm:$0xff]
    %v302 = vld [vmem:[%s1 + $0xe0] sm:$0xff]
    %v303 = vld [vmem:[%s1 + $0xe8] sm:$0xff]
    %v304 = vld [vmem:[%s1 + $0xf0] sm:$0xff]
    %v305 = vld [vmem:[%s1 + $0xf8] sm:$0xff]
    %v306 = vld [vmem:[%s1 + $0x100] sm:$0xff]
    %v307 = vld [vmem:[%s1 + $0x108] sm:$0xff]
    %v308 = vld [vmem:[%s1 + $0x110] sm:$0xff]
    %v309 = vld [vmem:[%s1 + $0x118] sm:$0xff]
    %v310 = vld [vmem:[%s1 + $0x120] sm:$0xff]
    %v311 = vld [vmem:[%s1 + $0x128] sm:$0xff]
    %v312 = vld [vmem:[%s1 + $0x130] sm:$0xff]
    %v313 = vld [vmem:[%s1 + $0x138] sm:$0xff]
    %v314 = vld [vmem:[%s2] sm:$0x3]
    %v316 = vperm.slane %v314, 0
    %v317 = vperm.slane %v314, 1
    %320 = vst [vmem:[#allocation1] ss:$2 sm:$0xff] %v254
    %s321 = scalar_lea.vmem [#allocation1], 1
    %322 = vst [vmem:[%s321] ss:$2 sm:$0xff] %v256
    %s323 = scalar_lea.vmem [#allocation1], 16
    %324 = vst [vmem:[%s323] ss:$2 sm:$0xff] %v257
    %s325 = scalar_lea.vmem [#allocation1], 17
    %326 = vst [vmem:[%s325] ss:$2 sm:$0xff] %v259
    %s327 = scalar_lea.vmem [#allocation1], 32
    %328 = vst [vmem:[%s327] ss:$2 sm:$0xff] %v260
    %s329 = scalar_lea.vmem [#allocation1], 33
    %330 = vst [vmem:[%s329] ss:$2 sm:$0xff] %v262
    %s331 = scalar_lea.vmem [#allocation1], 48
    %332 = vst [vmem:[%s331] ss:$2 sm:$0xff] %v263
    %s333 = scalar_lea.vmem [#allocation1], 49
    %334 = vst [vmem:[%s333] ss:$2 sm:$0xff] %v264
    %v335 = vld.sshfl [vmem:[#allocation1] sm:$0xff pattern:$0x75316420]
    %v336 = vld.sshfl [vmem:[#allocation1 + $0x8] sm:$0xff pattern:$0x75316420]
    %v337 = vld.sshfl [vmem:[#allocation1 + $0x10] sm:$0xff pattern:$0x75316420]
    %v338 = vld.sshfl [vmem:[#allocation1 + $0x18] sm:$0xff pattern:$0x75316420]
    %v339 = vld.sshfl [vmem:[#allocation1 + $0x20] sm:$0xff pattern:$0x75316420]
    %v340 = vld.sshfl [vmem:[#allocation1 + $0x28] sm:$0xff pattern:$0x75316420]
    %v341 = vld.sshfl [vmem:[#allocation1 + $0x30] sm:$0xff pattern:$0x75316420]
    %v342 = vld.sshfl [vmem:[#allocation1 + $0x38] sm:$0xff pattern:$0x75316420]
    %343 = vst [vmem:[#allocation1] ss:$2 sm:$0xff] %v266
    %344 = vst [vmem:[%s321] ss:$2 sm:$0xff] %v267
    %345 = vst [vmem:[%s323] ss:$2 sm:$0xff] %v269
    %346 = vst [vmem:[%s325] ss:$2 sm:$0xff] %v270
    %347 = vst [vmem:[%s327] ss:$2 sm:$0xff] %v272
    %348 = vst [vmem:[%s329] ss:$2 sm:$0xff] %v273
    %v349 = vld.sshfl [vmem:[#allocation1] sm:$0xff pattern:$0x75316420]
    %v350 = vld.sshfl [vmem:[#allocation1 + $0x8] sm:$0xff pattern:$0x75316420]
    %v351 = vld.sshfl [vmem:[#allocation1 + $0x10] sm:$0xff pattern:$0x75316420]
    %v352 = vld.sshfl [vmem:[#allocation1 + $0x18] sm:$0xff pattern:$0x75316420]
    %v353 = vld.sshfl [vmem:[#allocation1 + $0x20] sm:$0xff pattern:$0x75316420]
    %v354 = vld.sshfl [vmem:[#allocation1 + $0x28] sm:$0xff pattern:$0x75316420]
    %v362 = vsel %vm211, %v336, 0
    %v364 = vsel %vm211, %v338, 0
    %v366 = vsel %vm211, %v340, 0
    %v368 = vsel %vm211, %v342, 0
    %v370 = vsel %vm211, %v350, 0
    %v372 = vsel %vm211, %v352, 0
    %v374 = vsel %vm211, %v354, 0
    %376 = vmatpush.msra.mxu0 %v304
    %377 = vmatpush.msra.mxu0 %v302
    %378 = vmatpush.msra.mxu0 %v300
    %379 = vmatpush.msra.mxu0 %v298
    %380 = vmatpush.msra.mxu0 %v296
    %381 = vmatpush.msra.mxu0 %v294
    %382 = vmatpush.msra.mxu0 %v292
    %383 = vmatpush.msra.mxu0 %v290
    %384 = vmatpush.msra.mxu0 %v288
    %385 = vmatpush.msra.mxu0 %v286
    %386 = vmatpush.msra.mxu0 %v284
    %387 = vmatpush.msra.mxu0 %v282
    %388 = vmatpush.msra.mxu0 %v280
    %389 = vmatpush.msra.mxu0 %v278
    %390 = vmatpush.msra.mxu0 %v276
    %391 = vmatpush.msra.mxu0 %v274
    %392 = vmatmul.f32.gmra.mxu0 %v335
    %v393 = vpop.f32.mrf.mxu0
    %v394 = vadd.f32 %v316, %v393
    %395 = vmatmul.f32.gmra.mxu0 %v337
    %v396 = vpop.f32.mrf.mxu0
    %v397 = vadd.f32 %v316, %v396
    %398 = vmatmul.f32.gmra.mxu0 %v339
    %v399 = vpop.f32.mrf.mxu0
    %v400 = vadd.f32 %v316, %v399
    %401 = vmatmul.f32.gmra.mxu0 %v341
    %v402 = vpop.f32.mrf.mxu0
    %v403 = vadd.f32 %v316, %v402
    %404 = vmatmul.f32.gmra.mxu0 %v349
    %v405 = vpop.f32.mrf.mxu0
    %v406 = vadd.f32 %v316, %v405
    %407 = vmatmul.f32.gmra.mxu0 %v351
    %v408 = vpop.f32.mrf.mxu0
    %v409 = vadd.f32 %v316, %v408
    %410 = vmatmul.f32.gmra.mxu0 %v353
    %v411 = vpop.f32.mrf.mxu0
    %v412 = vadd.f32 %v316, %v411
    %413 = vdwg.mxu0
    %414 = vmatpush.msra.mxu0 0.0
    %415 = vmatpush.msra.mxu0 0.0
    %416 = vmatpush.msra.mxu0 0.0
    %417 = vmatpush.msra.mxu0 0.0
    %418 = vmatpush.msra.mxu0 0.0
    %419 = vmatpush.msra.mxu0 0.0
    %420 = vmatpush.msra.mxu0 0.0
    %421 = vmatpush.msra.mxu0 0.0
    %422 = vmatpush.msra.mxu0 0.0
    %423 = vmatpush.msra.mxu0 0.0
    %424 = vmatpush.msra.mxu0 0.0
    %425 = vmatpush.msra.mxu0 0.0
    %426 = vmatpush.msra.mxu0 %v312
    %427 = vmatpush.msra.mxu0 %v310
    %428 = vmatpush.msra.mxu0 %v308
    %429 = vmatpush.msra.mxu0 %v306
    %430 = vmatmul.f32.gmra.mxu0 %v362
    %v431 = vpop.f32.mrf.mxu0
    %v432 = vadd.f32 %v394, %v431
    %433 = vmatmul.f32.gmra.mxu0 %v364
    %v434 = vpop.f32.mrf.mxu0
    %v435 = vadd.f32 %v397, %v434
    %436 = vmatmul.f32.gmra.mxu0 %v366
    %v437 = vpop.f32.mrf.mxu0
    %v438 = vadd.f32 %v400, %v437
    %439 = vmatmul.f32.gmra.mxu0 %v368
    %v440 = vpop.f32.mrf.mxu0
    %v441 = vadd.f32 %v403, %v440
    %442 = vmatmul.f32.gmra.mxu0 %v370
    %v443 = vpop.f32.mrf.mxu0
    %v444 = vadd.f32 %v406, %v443
    %445 = vmatmul.f32.gmra.mxu0 %v372
    %v446 = vpop.f32.mrf.mxu0
    %v447 = vadd.f32 %v409, %v446
    %448 = vmatmul.f32.gmra.mxu0 %v374
    %v449 = vpop.f32.mrf.mxu0
    %v450 = vadd.f32 %v412, %v449
    %451 = vdwg.mxu0
    %452 = vmatpush.msra.mxu0 %v305
    %453 = vmatpush.msra.mxu0 %v303
    %454 = vmatpush.msra.mxu0 %v301
    %455 = vmatpush.msra.mxu0 %v299
    %456 = vmatpush.msra.mxu0 %v297
    %457 = vmatpush.msra.mxu0 %v295
    %458 = vmatpush.msra.mxu0 %v293
    %459 = vmatpush.msra.mxu0 %v291
    %460 = vmatpush.msra.mxu0 %v289
    %461 = vmatpush.msra.mxu0 %v287
    %462 = vmatpush.msra.mxu0 %v285
    %463 = vmatpush.msra.mxu0 %v283
    %464 = vmatpush.msra.mxu0 %v281
    %465 = vmatpush.msra.mxu0 %v279
    %466 = vmatpush.msra.mxu0 %v277
    %467 = vmatpush.msra.mxu0 %v275
    %468 = vmatmul.f32.gmra.mxu0 %v335
    %v469 = vpop.f32.mrf.mxu0
    %v470 = vadd.f32 %v317, %v469
    %471 = vmatmul.f32.gmra.mxu0 %v337
    %v472 = vpop.f32.mrf.mxu0
    %v473 = vadd.f32 %v317, %v472
    %474 = vmatmul.f32.gmra.mxu0 %v339
    %v475 = vpop.f32.mrf.mxu0
    %v476 = vadd.f32 %v317, %v475
    %477 = vmatmul.f32.gmra.mxu0 %v341
    %v478 = vpop.f32.mrf.mxu0
    %v479 = vadd.f32 %v317, %v478
    %480 = vmatmul.f32.gmra.mxu0 %v349
    %v481 = vpop.f32.mrf.mxu0
    %v482 = vadd.f32 %v317, %v481
    %483 = vmatmul.f32.gmra.mxu0 %v351
    %v484 = vpop.f32.mrf.mxu0
    %v485 = vadd.f32 %v317, %v484
    %486 = vmatmul.f32.gmra.mxu0 %v353
    %v487 = vpop.f32.mrf.mxu0
    %v488 = vadd.f32 %v317, %v487
    %489 = vdwg.mxu0
    %490 = vmatpush.msra.mxu0 0.0
    %491 = vmatpush.msra.mxu0 0.0
    %492 = vmatpush.msra.mxu0 0.0
    %493 = vmatpush.msra.mxu0 0.0
    %494 = vmatpush.msra.mxu0 0.0
    %495 = vmatpush.msra.mxu0 0.0
    %496 = vmatpush.msra.mxu0 0.0
    %497 = vmatpush.msra.mxu0 0.0
    %498 = vmatpush.msra.mxu0 0.0
    %499 = vmatpush.msra.mxu0 0.0
    %500 = vmatpush.msra.mxu0 0.0
    %501 = vmatpush.msra.mxu0 0.0
    %502 = vmatpush.msra.mxu0 %v313
    %503 = vmatpush.msra.mxu0 %v311
    %504 = vmatpush.msra.mxu0 %v309
    %505 = vmatpush.msra.mxu0 %v307
    %506 = vmatmul.f32.gmra.mxu0 %v362
    %v507 = vpop.f32.mrf.mxu0
    %v508 = vadd.f32 %v470, %v507
    %509 = vmatmul.f32.gmra.mxu0 %v364
    %v510 = vpop.f32.mrf.mxu0
    %v511 = vadd.f32 %v473, %v510
    %512 = vmatmul.f32.gmra.mxu0 %v366
    %v513 = vpop.f32.mrf.mxu0
    %v514 = vadd.f32 %v476, %v513
    %515 = vmatmul.f32.gmra.mxu0 %v368
    %v516 = vpop.f32.mrf.mxu0
    %v517 = vadd.f32 %v479, %v516
    %518 = vmatmul.f32.gmra.mxu0 %v370
    %v519 = vpop.f32.mrf.mxu0
    %v520 = vadd.f32 %v482, %v519
    %521 = vmatmul.f32.gmra.mxu0 %v372
    %v522 = vpop.f32.mrf.mxu0
    %v523 = vadd.f32 %v485, %v522
    %524 = vmatmul.f32.gmra.mxu0 %v374
    %v525 = vpop.f32.mrf.mxu0
    %v526 = vadd.f32 %v488, %v525
    %527 = vdwg.mxu0
    %v528 = vmax.f32 %v432, 0.0
    %v529 = vmax.f32 %v508, 0.0
    %v530 = vmax.f32 %v435, 0.0
    %v531 = vmax.f32 %v511, 0.0
    %v532 = vmax.f32 %v438, 0.0
    %v533 = vmax.f32 %v514, 0.0
    %v534 = vmax.f32 %v441, 0.0
    %v535 = vmax.f32 %v517, 0.0
    %v536 = vmax.f32 %v444, 0.0
    %v537 = vmax.f32 %v520, 0.0
    %v538 = vmax.f32 %v447, 0.0
    %v539 = vmax.f32 %v523, 0.0
    %v540 = vmax.f32 %v450, 0.0
    %v541 = vmax.f32 %v526, 0.0
    %v542 = vld [vmem:[%s3] sm:$0xff]
    %v543 = vld [vmem:[%s3 + $0x8] sm:$0xff]
    %v544 = vld [vmem:[%s3 + $0x10] sm:$0xff]
    %v545 = vld [vmem:[%s3 + $0x18] sm:$0xff]
    %v546 = vld [vmem:[%s3 + $0x20] sm:$0xff]
    %v547 = vld [vmem:[%s3 + $0x28] sm:$0xff]
    %v548 = vld [vmem:[%s3 + $0x30] sm:$0xff]
    %v549 = vld [vmem:[%s3 + $0x38] sm:$0xff]
    %v550 = vld [vmem:[%s3 + $0x40] sm:$0xff]
    %v551 = vld [vmem:[%s3 + $0x48] sm:$0xff]
    %v552 = vld [vmem:[%s3 + $0x50] sm:$0xff]
    %v553 = vld [vmem:[%s3 + $0x58] sm:$0xff]
    %v554 = vld [vmem:[%s3 + $0x60] sm:$0xff]
    %v555 = vld [vmem:[%s3 + $0x68] sm:$0xff]
    %v556 = vld [vmem:[%s3 + $0x70] sm:$0xff]
    %v557 = vld [vmem:[%s3 + $0x78] sm:$0xff]
    %v558 = vld [vmem:[%s3 + $0x80] sm:$0xff]
    %v559 = vld [vmem:[%s3 + $0x88] sm:$0xff]
    %v560 = vld [vmem:[%s3 + $0x90] sm:$0xff]
    %v561 = vld [vmem:[%s3 + $0x98] sm:$0xff]
    %v562 = vld [vmem:[%s3 + $0xa0] sm:$0xff]
    %vm563 = vcmask 326656
    %v565 = vsel %vm563, %v529, 0
    %v568 = vsel %vm563, %v531, 0
    %v571 = vsel %vm563, %v533, 0
    %v574 = vsel %vm563, %v535, 0
    %v577 = vsel %vm563, %v537, 0
    %v580 = vsel %vm563, %v539, 0
    %v583 = vsel %vm563, %v541, 0
    %585 = vmatpush.msra.mxu0 %v557
    %586 = vmatpush.msra.mxu0 %v556
    %587 = vmatpush.msra.mxu0 %v555
    %588 = vmatpush.msra.mxu0 %v554
    %589 = vmatpush.msra.mxu0 %v553
    %590 = vmatpush.msra.mxu0 %v552
    %591 = vmatpush.msra.mxu0 %v551
    %592 = vmatpush.msra.mxu0 %v550
    %593 = vmatpush.msra.mxu0 %v549
    %594 = vmatpush.msra.mxu0 %v548
    %595 = vmatpush.msra.mxu0 %v547
    %596 = vmatpush.msra.mxu0 %v546
    %597 = vmatpush.msra.mxu0 %v545
    %598 = vmatpush.msra.mxu0 %v544
    %599 = vmatpush.msra.mxu0 %v543
    %600 = vmatpush.msra.mxu0 %v542
    %601 = vmatmul.f32.gmra.mxu0 %v528
    %v602 = vpop.f32.mrf.mxu0
    %v603 = vadd.f32 0.0, %v602
    %604 = vmatmul.f32.gmra.mxu0 %v530
    %v605 = vpop.f32.mrf.mxu0
    %v606 = vadd.f32 0.0, %v605
    %607 = vmatmul.f32.gmra.mxu0 %v532
    %v608 = vpop.f32.mrf.mxu0
    %v609 = vadd.f32 0.0, %v608
    %610 = vmatmul.f32.gmra.mxu0 %v534
    %v611 = vpop.f32.mrf.mxu0
    %v612 = vadd.f32 0.0, %v611
    %613 = vmatmul.f32.gmra.mxu0 %v536
    %v614 = vpop.f32.mrf.mxu0
    %v615 = vadd.f32 0.0, %v614
    %616 = vmatmul.f32.gmra.mxu0 %v538
    %v617 = vpop.f32.mrf.mxu0
    %v618 = vadd.f32 0.0, %v617
    %619 = vmatmul.f32.gmra.mxu0 %v540
    %v620 = vpop.f32.mrf.mxu0
    %v621 = vadd.f32 0.0, %v620
    %622 = vdwg.mxu0
    %623 = vmatpush.msra.mxu0 0.0
    %624 = vmatpush.msra.mxu0 0.0
    %625 = vmatpush.msra.mxu0 0.0
    %626 = vmatpush.msra.mxu0 0.0
    %627 = vmatpush.msra.mxu0 0.0
    %628 = vmatpush.msra.mxu0 0.0
    %629 = vmatpush.msra.mxu0 0.0
    %630 = vmatpush.msra.mxu0 0.0
    %631 = vmatpush.msra.mxu0 0.0
    %632 = vmatpush.msra.mxu0 0.0
    %633 = vmatpush.msra.mxu0 0.0
    %634 = vmatpush.msra.mxu0 %v562
    %635 = vmatpush.msra.mxu0 %v561
    %636 = vmatpush.msra.mxu0 %v560
    %637 = vmatpush.msra.mxu0 %v559
    %638 = vmatpush.msra.mxu0 %v558
    %639 = vmatmul.f32.gmra.mxu0 %v565
    %v640 = vpop.f32.mrf.mxu0
    %v641 = vadd.f32 %v603, %v640
    %642 = vmatmul.f32.gmra.mxu0 %v568
    %v643 = vpop.f32.mrf.mxu0
    %v644 = vadd.f32 %v606, %v643
    %645 = vmatmul.f32.gmra.mxu0 %v571
    %v646 = vpop.f32.mrf.mxu0
    %v647 = vadd.f32 %v609, %v646
    %648 = vmatmul.f32.gmra.mxu0 %v574
    %v649 = vpop.f32.mrf.mxu0
    %v650 = vadd.f32 %v612, %v649
    %651 = vmatmul.f32.gmra.mxu0 %v577
    %v652 = vpop.f32.mrf.mxu0
    %v653 = vadd.f32 %v615, %v652
    %654 = vmatmul.f32.gmra.mxu0 %v580
    %v655 = vpop.f32.mrf.mxu0
    %v656 = vadd.f32 %v618, %v655
    %657 = vmatmul.f32.gmra.mxu0 %v583
    %v658 = vpop.f32.mrf.mxu0
    %v659 = vadd.f32 %v621, %v658
    %660 = vdwg.mxu0
    %v661 = vld [vmem:[%s4] sm:$0xff]
    %v662 = vld [vmem:[%s4 + $0x8] sm:$0xff]
    %v663 = vld [vmem:[%s4 + $0x10] sm:$0xff]
    %v664 = vld [vmem:[%s4 + $0x18] sm:$0xff]
    %v665 = vld [vmem:[%s4 + $0x20] sm:$0xff]
    %v666 = vld [vmem:[%s4 + $0x28] sm:$0xff]
    %v667 = vld [vmem:[%s4 + $0x30] sm:$0xff]
    %v668 = vld [vmem:[%s4 + $0x38] sm:$0xff]
    %v669 = vld [vmem:[%s4 + $0x40] sm:$0xff]
    %v670 = vld [vmem:[%s4 + $0x48] sm:$0xff]
    %v671 = vld [vmem:[%s4 + $0x50] sm:$0xff]
    %v672 = vld [vmem:[%s4 + $0x58] sm:$0xff]
    %v673 = vld [vmem:[%s4 + $0x60] sm:$0xff]
    %v674 = vld [vmem:[%s4 + $0x68] sm:$0xff]
    %v675 = vld [vmem:[%s4 + $0x70] sm:$0xff]
    %v676 = vld [vmem:[%s4 + $0x78] sm:$0xff]
    %v677 = vld [vmem:[%s4 + $0x80] sm:$0xff]
    %v678 = vld [vmem:[%s4 + $0x88] sm:$0xff]
    %v679 = vld [vmem:[%s4 + $0x90] sm:$0xff]
    %v680 = vld [vmem:[%s4 + $0x98] sm:$0xff]
    %v681 = vld [vmem:[%s4 + $0xa0] sm:$0xff]
    %682 = vmatpush.msra.mxu0 %v676
    %683 = vmatpush.msra.mxu0 %v675
    %684 = vmatpush.msra.mxu0 %v674
    %685 = vmatpush.msra.mxu0 %v673
    %686 = vmatpush.msra.mxu0 %v672
    %687 = vmatpush.msra.mxu0 %v671
    %688 = vmatpush.msra.mxu0 %v670
    %689 = vmatpush.msra.mxu0 %v669
    %690 = vmatpush.msra.mxu0 %v668
    %691 = vmatpush.msra.mxu0 %v667
    %692 = vmatpush.msra.mxu0 %v666
    %693 = vmatpush.msra.mxu0 %v665
    %694 = vmatpush.msra.mxu0 %v664
    %695 = vmatpush.msra.mxu0 %v663
    %696 = vmatpush.msra.mxu0 %v662
    %697 = vmatpush.msra.mxu0 %v661
    %698 = vmatmul.f32.gmra.mxu0 %v528
    %v699 = vpop.f32.mrf.mxu0
    %v700 = vadd.f32 0.0, %v699
    %701 = vmatmul.f32.gmra.mxu0 %v530
    %v702 = vpop.f32.mrf.mxu0
    %v703 = vadd.f32 0.0, %v702
    %704 = vmatmul.f32.gmra.mxu0 %v532
    %v705 = vpop.f32.mrf.mxu0
    %v706 = vadd.f32 0.0, %v705
    %707 = vmatmul.f32.gmra.mxu0 %v534
    %v708 = vpop.f32.mrf.mxu0
    %v709 = vadd.f32 0.0, %v708
    %710 = vmatmul.f32.gmra.mxu0 %v536
    %v711 = vpop.f32.mrf.mxu0
    %v712 = vadd.f32 0.0, %v711
    %713 = vmatmul.f32.gmra.mxu0 %v538
    %v714 = vpop.f32.mrf.mxu0
    %v715 = vadd.f32 0.0, %v714
    %716 = vmatmul.f32.gmra.mxu0 %v540
    %v717 = vpop.f32.mrf.mxu0
    %v718 = vadd.f32 0.0, %v717
    %719 = vdwg.mxu0
    %720 = vmatpush.msra.mxu0 0.0
    %721 = vmatpush.msra.mxu0 0.0
    %722 = vmatpush.msra.mxu0 0.0
    %723 = vmatpush.msra.mxu0 0.0
    %724 = vmatpush.msra.mxu0 0.0
    %725 = vmatpush.msra.mxu0 0.0
    %726 = vmatpush.msra.mxu0 0.0
    %727 = vmatpush.msra.mxu0 0.0
    %728 = vmatpush.msra.mxu0 0.0
    %729 = vmatpush.msra.mxu0 0.0
    %730 = vmatpush.msra.mxu0 0.0
    %731 = vmatpush.msra.mxu0 %v681
    %732 = vmatpush.msra.mxu0 %v680
    %733 = vmatpush.msra.mxu0 %v679
    %734 = vmatpush.msra.mxu0 %v678
    %735 = vmatpush.msra.mxu0 %v677
    %736 = vmatmul.f32.gmra.mxu0 %v565
    %v737 = vpop.f32.mrf.mxu0
    %v738 = vadd.f32 %v700, %v737
    %739 = vmatmul.f32.gmra.mxu0 %v568
    %v740 = vpop.f32.mrf.mxu0
    %v741 = vadd.f32 %v703, %v740
    %742 = vmatmul.f32.gmra.mxu0 %v571
    %v743 = vpop.f32.mrf.mxu0
    %v744 = vadd.f32 %v706, %v743
    %745 = vmatmul.f32.gmra.mxu0 %v574
    %v746 = vpop.f32.mrf.mxu0
    %v747 = vadd.f32 %v709, %v746
    %748 = vmatmul.f32.gmra.mxu0 %v577
    %v749 = vpop.f32.mrf.mxu0
    %v750 = vadd.f32 %v712, %v749
    %751 = vmatmul.f32.gmra.mxu0 %v580
    %v752 = vpop.f32.mrf.mxu0
    %v753 = vadd.f32 %v715, %v752
    %754 = vmatmul.f32.gmra.mxu0 %v583
    %v755 = vpop.f32.mrf.mxu0
    %v756 = vadd.f32 %v718, %v755
    %757 = vdwg.mxu0
    %v758 = vmax.f32 %v641, %v738
    %v759 = vmax.f32 %v644, %v741
    %v760 = vmax.f32 %v647, %v744
    %v761 = vmax.f32 %v650, %v747
    %v762 = vmax.f32 %v653, %v750
    %v763 = vmax.f32 %v656, %v753
    %v764 = vmax.f32 %v659, %v756
    %v765 = vld [vmem:[%s5] sm:$0xff]
    %v766 = vld [vmem:[%s5 + $0x8] sm:$0xff]
    %v767 = vld [vmem:[%s5 + $0x10] sm:$0xff]
    %v768 = vld [vmem:[%s5 + $0x18] sm:$0xf]
    %vm769 = vcmask 457728
    %v771 = vsel %vm769, %v765, 0
    %v774 = vsel %vm769, %v766, 0
    %v777 = vsel %vm769, %v767, 0
    %v780 = vsel %vm769, %v768, 0
    %782 = vmatpush.msra.mxu0 0.0
    %783 = vmatpush.msra.mxu0 0.0
    %784 = vmatpush.msra.mxu0 0.0
    %785 = vmatpush.msra.mxu0 0.0
    %786 = vmatpush.msra.mxu0 0.0
    %787 = vmatpush.msra.mxu0 0.0
    %788 = vmatpush.msra.mxu0 0.0
    %789 = vmatpush.msra.mxu0 0.0
    %790 = vmatpush.msra.mxu0 0.0
    %791 = vmatpush.msra.mxu0 %v764
    %792 = vmatpush.msra.mxu0 %v763
    %793 = vmatpush.msra.mxu0 %v762
    %794 = vmatpush.msra.mxu0 %v761
    %795 = vmatpush.msra.mxu0 %v760
    %796 = vmatpush.msra.mxu0 %v759
    %797 = vmatpush.msra.mxu0 %v758
    %798 = vmatmul.f32.gmra.mxu0 %v771
    %v799 = vpop.f32.mrf.mxu0
    %v800 = vadd.f32 0.0, %v799
    %801 = vmatmul.f32.gmra.mxu0 %v774
    %v802 = vpop.f32.mrf.mxu0
    %v803 = vadd.f32 0.0, %v802
    %804 = vmatmul.f32.gmra.mxu0 %v777
    %v805 = vpop.f32.mrf.mxu0
    %v806 = vadd.f32 0.0, %v805
    %807 = vmatmul.f32.gmra.mxu0 %v780
    %v808 = vpop.f32.mrf.mxu0
    %v809 = vadd.f32 0.0, %v808
    %810 = vdwg.mxu0
    %v811 = vld [vmem:[%s6] sm:$0xff]
    %v812 = vld [vmem:[%s6 + $0x8] sm:$0xff]
    %v813 = vld [vmem:[%s6 + $0x10] sm:$0xff]
    %v814 = vld [vmem:[%s6 + $0x18] sm:$0xf]
    %v816 = vsel %vm769, %v811, 0
    %v819 = vsel %vm769, %v812, 0
    %v822 = vsel %vm769, %v813, 0
    %v825 = vsel %vm769, %v814, 0
    %827 = vmatpush.msra.mxu0 0.0
    %828 = vmatpush.msra.mxu0 0.0
    %829 = vmatpush.msra.mxu0 0.0
    %830 = vmatpush.msra.mxu0 0.0
    %831 = vmatpush.msra.mxu0 0.0
    %832 = vmatpush.msra.mxu0 0.0
    %833 = vmatpush.msra.mxu0 0.0
    %834 = vmatpush.msra.mxu0 0.0
    %835 = vmatpush.msra.mxu0 0.0
    %836 = vmatpush.msra.mxu0 %v764
    %837 = vmatpush.msra.mxu0 %v763
    %838 = vmatpush.msra.mxu0 %v762
    %839 = vmatpush.msra.mxu0 %v761
    %840 = vmatpush.msra.mxu0 %v760
    %841 = vmatpush.msra.mxu0 %v759
    %842 = vmatpush.msra.mxu0 %v758
    %843 = vmatmul.f32.gmra.mxu0 %v816
    %v844 = vpop.f32.mrf.mxu0
    %v845 = vadd.f32 0.0, %v844
    %846 = vmatmul.f32.gmra.mxu0 %v819
    %v847 = vpop.f32.mrf.mxu0
    %v848 = vadd.f32 0.0, %v847
    %849 = vmatmul.f32.gmra.mxu0 %v822
    %v850 = vpop.f32.mrf.mxu0
    %v851 = vadd.f32 0.0, %v850
    %852 = vmatmul.f32.gmra.mxu0 %v825
    %v853 = vpop.f32.mrf.mxu0
    %v854 = vadd.f32 0.0, %v853
    %855 = vdwg.mxu0
    %v856 = vmax.f32 %v800, %v845
    %v857 = vmax.f32 %v803, %v848
    %v858 = vmax.f32 %v806, %v851
    %v859 = vmax.f32 %v809, %v854
    %v864 = vrot.slane %v856, 2
    %v865 = vrot.slane %v856, 4
    %v866 = vrot.slane %v856, 6
    %v867 = vrot.slane %v857, 2
    %v868 = vrot.slane %v857, 4
    %v869 = vrot.slane %v857, 6
    %v870 = vrot.slane %v858, 2
    %v871 = vrot.slane %v858, 4
    %v872 = vrot.slane %v858, 6
    %v873 = vrot.slane %v859, 2
    %874 = vst [vmem:[#allocation1] ss:$4 sm:$0xff] %v856
    %s875 = scalar_lea.vmem [#allocation1], 1
    %876 = vst [vmem:[%s875] ss:$4 sm:$0xff] %v864
    %s877 = scalar_lea.vmem [#allocation1], 2
    %878 = vst [vmem:[%s877] ss:$4 sm:$0xff] %v865
    %s879 = scalar_lea.vmem [#allocation1], 3
    %880 = vst [vmem:[%s879] ss:$4 sm:$0xff] %v866
    %s881 = scalar_lea.vmem [#allocation1], 32
    %882 = vst [vmem:[%s881] ss:$4 sm:$0xff] %v857
    %v883 = vld.sshfl [vmem:[#allocation1] sm:$0xff pattern:$0x73625140]
    %v884 = vld.sshfl [vmem:[#allocation1 + $0x20] sm:$0xff pattern:$0x73625140]
    %885 = vst [vmem:[#allocation1] ss:$4 sm:$0xff] %v869
    %886 = vst [vmem:[%s875] ss:$4 sm:$0xff] %v858
    %887 = vst [vmem:[%s877] ss:$4 sm:$0xff] %v870
    %888 = vst [vmem:[%s879] ss:$4 sm:$0xff] %v871
    %889 = vst [vmem:[%s881] ss:$4 sm:$0xff] %v872
    %v890 = vld.sshfl [vmem:[#allocation1] sm:$0xff pattern:$0x73625140]
    %v891 = vld.sshfl [vmem:[#allocation1 + $0x20] sm:$0xff pattern:$0x73625140]
    %896 = vst [vmem:[#allocation1] ss:$4 sm:$0xff] %v856
    %s897 = scalar_lea.vmem [#allocation1], 1
    %898 = vst [vmem:[%s897] ss:$4 sm:$0xff] %v864
    %s899 = scalar_lea.vmem [#allocation1], 2
    %900 = vst [vmem:[%s899] ss:$4 sm:$0xff] %v865
    %s901 = scalar_lea.vmem [#allocation1], 3
    %902 = vst [vmem:[%s901] ss:$4 sm:$0xff] %v866
    %s903 = scalar_lea.vmem [#allocation1], 32
    %904 = vst [vmem:[%s903] ss:$4 sm:$0xff] %v857
    %s905 = scalar_lea.vmem [#allocation1], 33
    %906 = vst [vmem:[%s905] ss:$4 sm:$0xff] %v867
    %v907 = vld.sshfl [vmem:[#allocation1] sm:$0xff pattern:$0x73625140]
    %v908 = vld.sshfl [vmem:[#allocation1 + $0x20] sm:$0xff pattern:$0x73625140]
    %909 = vst [vmem:[#allocation1] ss:$4 sm:$0xff] %v869
    %910 = vst [vmem:[%s897] ss:$4 sm:$0xff] %v858
    %911 = vst [vmem:[%s899] ss:$4 sm:$0xff] %v870
    %912 = vst [vmem:[%s901] ss:$4 sm:$0xff] %v871
    %913 = vst [vmem:[%s903] ss:$4 sm:$0xff] %v872
    %914 = vst [vmem:[%s905] ss:$4 sm:$0xff] %v859
    %v915 = vld.sshfl [vmem:[#allocation1] sm:$0xff pattern:$0x73625140]
    %v916 = vld.sshfl [vmem:[#allocation1 + $0x20] sm:$0xff pattern:$0x73625140]
    %v917 = vrot.slane %v907, 1
    %v918 = vrot.slane %v908, 1
    %v919 = vsel %vm79, %v917, %v918
    %v920 = vrot.slane %v915, 1
    %v921 = vrot.slane %v916, 1
    %v922 = vsel %vm79, %v920, %v921
    %923 = vrot.lane.b32.xlu0 %v919, 84
    %v924 = vpop.permute.xlu0 %923
    %925 = vrot.lane.b32.xlu0 %v918, 84
    %v926 = vpop.permute.xlu0 %925
    %927 = vrot.lane.b32.xlu0 %v922, 84
    %v928 = vpop.permute.xlu0 %927
    %929 = vrot.lane.b32.xlu0 %v921, 84
    %v930 = vpop.permute.xlu0 %929
    %935 = vst [vmem:[#allocation1] ss:$4 sm:$0xff] %v864
    %s936 = scalar_lea.vmem [#allocation1], 1
    %937 = vst [vmem:[%s936] ss:$4 sm:$0xff] %v865
    %s938 = scalar_lea.vmem [#allocation1], 2
    %939 = vst [vmem:[%s938] ss:$4 sm:$0xff] %v866
    %s940 = scalar_lea.vmem [#allocation1], 3
    %941 = vst [vmem:[%s940] ss:$4 sm:$0xff] %v857
    %s942 = scalar_lea.vmem [#allocation1], 32
    %943 = vst [vmem:[%s942] ss:$4 sm:$0xff] %v867
    %v944 = vld.sshfl [vmem:[#allocation1] sm:$0xff pattern:$0x73625140]
    %v945 = vld.sshfl [vmem:[#allocation1 + $0x20] sm:$0xff pattern:$0x73625140]
    %946 = vst [vmem:[#allocation1] ss:$4 sm:$0xff] %v858
    %947 = vst [vmem:[%s936] ss:$4 sm:$0xff] %v870
    %948 = vst [vmem:[%s938] ss:$4 sm:$0xff] %v871
    %949 = vst [vmem:[%s940] ss:$4 sm:$0xff] %v872
    %950 = vst [vmem:[%s942] ss:$4 sm:$0xff] %v859
    %v951 = vld.sshfl [vmem:[#allocation1] sm:$0xff pattern:$0x73625140]
    %v952 = vld.sshfl [vmem:[#allocation1 + $0x20] sm:$0xff pattern:$0x73625140]
    %953 = vrot.lane.b32.xlu0 %v944, 40
    %v954 = vpop.permute.xlu0 %953
    %955 = vrot.lane.b32.xlu0 %v945, 40
    %v956 = vpop.permute.xlu0 %955
    %957 = vrot.lane.b32.xlu0 %v951, 40
    %v958 = vpop.permute.xlu0 %957
    %959 = vrot.lane.b32.xlu0 %v952, 40
    %v960 = vpop.permute.xlu0 %959
    %965 = vst [vmem:[#allocation1] ss:$4 sm:$0xff] %v864
    %s966 = scalar_lea.vmem [#allocation1], 1
    %967 = vst [vmem:[%s966] ss:$4 sm:$0xff] %v865
    %s968 = scalar_lea.vmem [#allocation1], 2
    %969 = vst [vmem:[%s968] ss:$4 sm:$0xff] %v866
    %s970 = scalar_lea.vmem [#allocation1], 3
    %971 = vst [vmem:[%s970] ss:$4 sm:$0xff] %v857
    %s972 = scalar_lea.vmem [#allocation1], 32
    %973 = vst [vmem:[%s972] ss:$4 sm:$0xff] %v867
    %s974 = scalar_lea.vmem [#allocation1], 33
    %975 = vst [vmem:[%s974] ss:$4 sm:$0xff] %v868
    %v976 = vld.sshfl [vmem:[#allocation1] sm:$0xff pattern:$0x73625140]
    %v977 = vld.sshfl [vmem:[#allocation1 + $0x20] sm:$0xff pattern:$0x73625140]
    %978 = vst [vmem:[#allocation1] ss:$4 sm:$0xff] %v858
    %979 = vst [vmem:[%s966] ss:$4 sm:$0xff] %v870
    %980 = vst [vmem:[%s968] ss:$4 sm:$0xff] %v871
    %981 = vst [vmem:[%s970] ss:$4 sm:$0xff] %v872
    %982 = vst [vmem:[%s972] ss:$4 sm:$0xff] %v859
    %983 = vst [vmem:[%s974] ss:$4 sm:$0xff] %v873
    %v984 = vld.sshfl [vmem:[#allocation1] sm:$0xff pattern:$0x73625140]
    %v985 = vld.sshfl [vmem:[#allocation1 + $0x20] sm:$0xff pattern:$0x73625140]
    %v986 = vrot.slane %v976, 1
    %v987 = vrot.slane %v977, 1
    %v988 = vsel %vm79, %v986, %v987
    %v989 = vrot.slane %v984, 1
    %v990 = vrot.slane %v985, 1
    %v991 = vsel %vm79, %v989, %v990
    %992 = vrot.lane.b32.xlu0 %v988, 124
    %v993 = vpop.permute.xlu0 %992
    %994 = vrot.lane.b32.xlu0 %v987, 124
    %v995 = vpop.permute.xlu0 %994
    %996 = vrot.lane.b32.xlu0 %v991, 124
    %v997 = vpop.permute.xlu0 %996
    %998 = vrot.lane.b32.xlu0 %v990, 124
    %v999 = vpop.permute.xlu0 %998
    %1004 = vst [vmem:[#allocation1] ss:$4 sm:$0xff] %v865
    %s1005 = scalar_lea.vmem [#allocation1], 1
    %1006 = vst [vmem:[%s1005] ss:$4 sm:$0xff] %v866
    %s1007 = scalar_lea.vmem [#allocation1], 2
    %1008 = vst [vmem:[%s1007] ss:$4 sm:$0xff] %v857
    %s1009 = scalar_lea.vmem [#allocation1], 3
    %1010 = vst [vmem:[%s1009] ss:$4 sm:$0xff] %v867
    %s1011 = scalar_lea.vmem [#allocation1], 32
    %1012 = vst [vmem:[%s1011] ss:$4 sm:$0xff] %v868
    %v1013 = vld.sshfl [vmem:[#allocation1] sm:$0xff pattern:$0x73625140]
    %v1014 = vld.sshfl [vmem:[#allocation1 + $0x20] sm:$0xff pattern:$0x73625140]
    %1015 = vst [vmem:[#allocation1] ss:$4 sm:$0xff] %v870
    %1016 = vst [vmem:[%s1005] ss:$4 sm:$0xff] %v871
    %1017 = vst [vmem:[%s1007] ss:$4 sm:$0xff] %v872
    %1018 = vst [vmem:[%s1009] ss:$4 sm:$0xff] %v859
    %1019 = vst [vmem:[%s1011] ss:$4 sm:$0xff] %v873
    %v1020 = vld.sshfl [vmem:[#allocation1] sm:$0xff pattern:$0x73625140]
    %v1021 = vld.sshfl [vmem:[#allocation1 + $0x20] sm:$0xff pattern:$0x73625140]
    %1022 = vrot.lane.b32.xlu0 %v1013, 80
    %v1023 = vpop.permute.xlu0 %1022
    %1024 = vrot.lane.b32.xlu0 %v1014, 80
    %v1025 = vpop.permute.xlu0 %1024
    %1026 = vrot.lane.b32.xlu0 %v1020, 80
    %v1027 = vpop.permute.xlu0 %1026
    %1028 = vrot.lane.b32.xlu0 %v1021, 80
    %v1029 = vpop.permute.xlu0 %1028
    %vm1034 = vcmask 687104
    %v1035 = vsel %vm1034, %v883, %v924
    %v1036 = vsel %vm1034, %v884, %v926
    %v1037 = vsel %vm1034, %v890, %v928
    %v1038 = vsel %vm1034, %v891, %v930
    %v1039 = vsel %vm563, %v924, %v954
    %v1040 = vsel %vm563, %v926, %v956
    %v1041 = vsel %vm563, %v928, %v958
    %v1042 = vsel %vm563, %v930, %v960
    %vm1043 = vcmask 1014784
    %v1044 = vsel %vm1043, %v1039, %v993
    %v1045 = vsel %vm1043, %v1040, %v995
    %v1046 = vsel %vm1043, %v1041, %v997
    %v1047 = vsel %vm1043, %v1042, %v999
    %vm1048 = vcmask 654336
    %v1049 = vsel %vm1048, %v993, %v1023
    %v1050 = vsel %vm1048, %v995, %v1025
    %v1051 = vsel %vm1048, %v997, %v1027
    %v1052 = vsel %vm1048, %v999, %v1029
    %v1065 = vrot.slane %v1044, 6
    %v1066 = vrot.slane %v1049, 4
    %v1067 = vrot.slane %v1023, 2
    %v1068 = vrot.slane %v1045, 6
    %v1069 = vrot.slane %v1050, 4
    %v1070 = vrot.slane %v1025, 2
    %v1071 = vrot.slane %v1046, 6
    %v1072 = vrot.slane %v1051, 4
    %v1073 = vrot.slane %v1027, 2
    %v1074 = vrot.slane %v1047, 6
    %v1075 = vrot.slane %v1052, 4
    %v1076 = vrot.slane %v1029, 2
    %vm1077 = vcmask 1041408
    %v1078 = vsel %vm1077, %v1035, %v1065
    %vm1079 = vcmask 1045508
    %v1080 = vsel %vm1079, %v1066, %v1067
    %v1081 = vsel %vm196, %v1078, %v1080
    %vm1082 = vcmask 1043458
    %v1083 = vsel %vm1082, %v1035, %v1065
    %v1084 = vsel %vm118, %v1067, %v1066
    %vm1085 = vcmask 1045506
    %v1086 = vsel %vm1085, %v1083, %v1084
    %v1087 = vrot.slane %v1086, 2
    %v1088 = vsel %vm1079, %v1035, %v1065
    %v1089 = vsel %vm1077, %v1066, %v1067
    %v1090 = vsel %vm196, %v1089, %v1088
    %v1091 = vrot.slane %v1090, 4
    %v1092 = vsel %vm118, %v1065, %v1035
    %v1093 = vsel %vm1082, %v1066, %v1067
    %v1094 = vsel %vm1085, %v1093, %v1092
    %v1095 = vrot.slane %v1094, 6
    %v1096 = vsel %vm1077, %v1036, %v1068
    %v1097 = vsel %vm1079, %v1069, %v1070
    %v1098 = vsel %vm196, %v1096, %v1097
    %v1099 = vsel %vm1077, %v1037, %v1071
    %v1100 = vsel %vm1079, %v1072, %v1073
    %v1101 = vsel %vm196, %v1099, %v1100
    %v1102 = vsel %vm1082, %v1037, %v1071
    %v1103 = vsel %vm118, %v1073, %v1072
    %v1104 = vsel %vm1085, %v1102, %v1103
    %v1105 = vrot.slane %v1104, 2
    %v1106 = vsel %vm1079, %v1037, %v1071
    %v1107 = vsel %vm1077, %v1072, %v1073
    %v1108 = vsel %vm196, %v1107, %v1106
    %v1109 = vrot.slane %v1108, 4
    %v1110 = vsel %vm118, %v1071, %v1037
    %v1111 = vsel %vm1082, %v1072, %v1073
    %v1112 = vsel %vm1085, %v1111, %v1110
    %v1113 = vrot.slane %v1112, 6
    %v1114 = vsel %vm1077, %v1038, %v1074
    %v1115 = vsel %vm1079, %v1075, %v1076
    %v1116 = vsel %vm196, %v1114, %v1115
    %v1117 = vld [vmem:[%s7] sm:$0xff]
    %v1118 = vld [vmem:[%s7 + $0x8] sm:$0xff]
    %v1119 = vld [vmem:[%s7 + $0x10] sm:$0xff]
    %v1120 = vld [vmem:[%s7 + $0x18] sm:$0xff]
    %v1121 = vld [vmem:[%s7 + $0x20] sm:$0xff]
    %v1122 = vld [vmem:[%s7 + $0x28] sm:$0xff]
    %v1123 = vld [vmem:[%s7 + $0x30] sm:$0xff]
    %v1124 = vld [vmem:[%s7 + $0x38] sm:$0xff]
    %v1125 = vld [vmem:[%s7 + $0x40] sm:$0xff]
    %v1126 = vld [vmem:[%s7 + $0x48] sm:$0xff]
    %v1127 = vld [vmem:[%s7 + $0x50] sm:$0xff]
    %v1128 = vld [vmem:[%s7 + $0x58] sm:$0xff]
    %v1129 = vld [vmem:[%s7 + $0x60] sm:$0xff]
    %v1130 = vld [vmem:[%s7 + $0x68] sm:$0xff]
    %v1131 = vld [vmem:[%s7 + $0x70] sm:$0xff]
    %v1132 = vld [vmem:[%s7 + $0x78] sm:$0xff]
    %v1133 = vld [vmem:[%s7 + $0x80] sm:$0xff]
    %v1134 = vld [vmem:[%s7 + $0x88] sm:$0xff]
    %v1135 = vld [vmem:[%s7 + $0x90] sm:$0xff]
    %v1136 = vld [vmem:[%s7 + $0x98] sm:$0xff]
    %v1137 = vld [vmem:[%s7 + $0xa0] sm:$0xff]
    %v1138 = vld [vmem:[%s7 + $0xa8] sm:$0xff]
    %v1139 = vld [vmem:[%s7 + $0xb0] sm:$0xff]
    %v1140 = vld [vmem:[%s7 + $0xb8] sm:$0xff]
    %v1141 = vld [vmem:[%s7 + $0xc0] sm:$0xff]
    %v1142 = vld [vmem:[%s7 + $0xc8] sm:$0xff]
    %v1143 = vld [vmem:[%s7 + $0xd0] sm:$0xff]
    %v1144 = vld [vmem:[%s7 + $0xd8] sm:$0xff]
    %v1145 = vld [vmem:[%s7 + $0xe0] sm:$0xff]
    %v1146 = vld [vmem:[%s7 + $0xe8] sm:$0xff]
    %v1147 = vld [vmem:[%s7 + $0xf0] sm:$0xff]
    %v1148 = vld [vmem:[%s7 + $0xf8] sm:$0xff]
    %v1149 = vld [vmem:[%s7 + $0x100] sm:$0xff]
    %v1150 = vld [vmem:[%s7 + $0x108] sm:$0xff]
    %v1151 = vld [vmem:[%s7 + $0x110] sm:$0xff]
    %v1152 = vld [vmem:[%s7 + $0x118] sm:$0xff]
    %v1153 = vld [vmem:[%s7 + $0x120] sm:$0xff]
    %v1154 = vld [vmem:[%s7 + $0x128] sm:$0xff]
    %v1155 = vld [vmem:[%s7 + $0x130] sm:$0xff]
    %v1156 = vld [vmem:[%s7 + $0x138] sm:$0xff]
    %v1157 = vld [vmem:[%s7 + $0x140] sm:$0xff]
    %v1158 = vld [vmem:[%s7 + $0x148] sm:$0xff]
    %v1159 = vld [vmem:[%s7 + $0x150] sm:$0xff]
    %v1160 = vld [vmem:[%s7 + $0x158] sm:$0xff]
    %v1161 = vld [vmem:[%s7 + $0x160] sm:$0xff]
    %v1162 = vld [vmem:[%s7 + $0x168] sm:$0xff]
    %v1163 = vld [vmem:[%s7 + $0x170] sm:$0xff]
    %v1164 = vld [vmem:[%s7 + $0x178] sm:$0xff]
    %v1165 = vld [vmem:[%s7 + $0x180] sm:$0xff]
    %v1166 = vld [vmem:[%s7 + $0x188] sm:$0xff]
    %v1167 = vld [vmem:[%s7 + $0x190] sm:$0xff]
    %v1168 = vld [vmem:[%s7 + $0x198] sm:$0xff]
    %v1169 = vld [vmem:[%s7 + $0x1a0] sm:$0xff]
    %v1170 = vld [vmem:[%s7 + $0x1a8] sm:$0xff]
    %v1171 = vld [vmem:[%s7 + $0x1b0] sm:$0xff]
    %v1172 = vld [vmem:[%s7 + $0x1b8] sm:$0xff]
    %v1173 = vld [vmem:[%s7 + $0x1c0] sm:$0xff]
    %v1174 = vld [vmem:[%s7 + $0x1c8] sm:$0xff]
    %v1175 = vld [vmem:[%s7 + $0x1d0] sm:$0xff]
    %v1176 = vld [vmem:[%s7 + $0x1d8] sm:$0xff]
    %v1177 = vld [vmem:[%s7 + $0x1e0] sm:$0xff]
    %v1178 = vld [vmem:[%s7 + $0x1e8] sm:$0xff]
    %v1179 = vld [vmem:[%s7 + $0x1f0] sm:$0xff]
    %v1180 = vld [vmem:[%s7 + $0x1f8] sm:$0xff]
    %v1181 = vld [vmem:[%s7 + $0x200] sm:$0xff]
    %v1182 = vld [vmem:[%s7 + $0x208] sm:$0xff]
    %v1183 = vld [vmem:[%s7 + $0x210] sm:$0xff]
    %v1184 = vld [vmem:[%s7 + $0x218] sm:$0xff]
    %v1185 = vld [vmem:[%s7 + $0x220] sm:$0xff]
    %v1186 = vld [vmem:[%s7 + $0x228] sm:$0xff]
    %v1187 = vld [vmem:[%s7 + $0x230] sm:$0xff]
    %v1188 = vld [vmem:[%s7 + $0x238] sm:$0xff]
    %v1189 = vld [vmem:[%s7 + $0x240] sm:$0xff]
    %v1190 = vld [vmem:[%s7 + $0x248] sm:$0xff]
    %v1191 = vld [vmem:[%s7 + $0x250] sm:$0xff]
    %v1192 = vld [vmem:[%s7 + $0x258] sm:$0xff]
    %v1193 = vld [vmem:[%s7 + $0x260] sm:$0xff]
    %v1194 = vld [vmem:[%s7 + $0x268] sm:$0xff]
    %v1195 = vld [vmem:[%s7 + $0x270] sm:$0xff]
    %v1196 = vld [vmem:[%s7 + $0x278] sm:$0xff]
    %v1197 = vld [vmem:[%s7 + $0x280] sm:$0xff]
    %v1198 = vld [vmem:[%s7 + $0x288] sm:$0xff]
    %v1199 = vld [vmem:[%s7 + $0x290] sm:$0xff]
    %v1200 = vld [vmem:[%s7 + $0x298] sm:$0xff]
    %v1201 = vld [vmem:[%s7 + $0x2a0] sm:$0xff]
    %v1202 = vld [vmem:[%s7 + $0x2a8] sm:$0xff]
    %v1203 = vld [vmem:[%s7 + $0x2b0] sm:$0xff]
    %v1204 = vld [vmem:[%s7 + $0x2b8] sm:$0xff]
    %v1205 = vld [vmem:[%s7 + $0x2c0] sm:$0xff]
    %v1206 = vld [vmem:[%s7 + $0x2c8] sm:$0xff]
    %v1207 = vld [vmem:[%s7 + $0x2d0] sm:$0xff]
    %v1208 = vld [vmem:[%s7 + $0x2d8] sm:$0xff]
    %v1209 = vld [vmem:[%s7 + $0x2e0] sm:$0xff]
    %v1210 = vld [vmem:[%s7 + $0x2e8] sm:$0xff]
    %v1211 = vld [vmem:[%s7 + $0x2f0] sm:$0xff]
    %v1212 = vld [vmem:[%s7 + $0x2f8] sm:$0xff]
    %v1213 = vld [vmem:[%s7 + $0x300] sm:$0xff]
    %v1214 = vld [vmem:[%s7 + $0x308] sm:$0xff]
    %v1215 = vld [vmem:[%s7 + $0x310] sm:$0xff]
    %v1216 = vld [vmem:[%s7 + $0x318] sm:$0xff]
    %v1217 = vld [vmem:[%s7 + $0x320] sm:$0xff]
    %v1218 = vld [vmem:[%s7 + $0x328] sm:$0xff]
    %v1219 = vld [vmem:[%s7 + $0x330] sm:$0xff]
    %v1220 = vld [vmem:[%s7 + $0x338] sm:$0xff]
    %v1221 = vld [vmem:[%s7 + $0x340] sm:$0xf]
    %v1222 = vld [vmem:[%s7 + $0x348] sm:$0xf]
    %v1223 = vld [vmem:[%s8] sm:$0x3]
    %v1225 = vperm.slane %v1223, 0
    %v1226 = vperm.slane %v1223, 1
    %1229 = vst [vmem:[#allocation1] ss:$4 sm:$0xff] %v1081
    %s1230 = scalar_lea.vmem [#allocation1], 1
    %1231 = vst [vmem:[%s1230] ss:$4 sm:$0xff] %v1087
    %s1232 = scalar_lea.vmem [#allocation1], 2
    %1233 = vst [vmem:[%s1232] ss:$4 sm:$0xff] %v1091
    %s1234 = scalar_lea.vmem [#allocation1], 3
    %1235 = vst [vmem:[%s1234] ss:$4 sm:$0xff] %v1095
    %s1236 = scalar_lea.vmem [#allocation1], 32
    %1237 = vst [vmem:[%s1236] ss:$4 sm:$0xff] %v1098
    %s1238 = scalar_lea.vmem [#allocation1], 33
    %1239 = vst [vmem:[%s1238] ss:$4 sm:$0xff] %v1101
    %s1240 = scalar_lea.vmem [#allocation1], 34
    %1241 = vst [vmem:[%s1240] ss:$4 sm:$0xff] %v1105
    %s1242 = scalar_lea.vmem [#allocation1], 35
    %1243 = vst [vmem:[%s1242] ss:$4 sm:$0xff] %v1109
    %v1244 = vld.sshfl [vmem:[#allocation1] sm:$0xff pattern:$0x73625140]
    %v1245 = vld.sshfl [vmem:[#allocation1 + $0x8] sm:$0xff pattern:$0x73625140]
    %v1246 = vld.sshfl [vmem:[#allocation1 + $0x10] sm:$0xff pattern:$0x73625140]
    %v1247 = vld.sshfl [vmem:[#allocation1 + $0x18] sm:$0xff pattern:$0x73625140]
    %v1248 = vld.sshfl [vmem:[#allocation1 + $0x20] sm:$0xff pattern:$0x73625140]
    %v1249 = vld.sshfl [vmem:[#allocation1 + $0x28] sm:$0xff pattern:$0x73625140]
    %v1250 = vld.sshfl [vmem:[#allocation1 + $0x30] sm:$0xff pattern:$0x73625140]
    %v1251 = vld.sshfl [vmem:[#allocation1 + $0x38] sm:$0xff pattern:$0x73625140]
    %1252 = vst [vmem:[#allocation1] ss:$4 sm:$0xff] %v1113
    %1253 = vst [vmem:[%s1230] ss:$4 sm:$0xff] %v1116
    %v1254 = vld.sshfl [vmem:[#allocation1] sm:$0xff pattern:$0x73625140]
    %v1255 = vld.sshfl [vmem:[#allocation1 + $0x8] sm:$0xff pattern:$0x73625140]
    %v1256 = vld.sshfl [vmem:[#allocation1 + $0x10] sm:$0xff pattern:$0x73625140]
    %v1257 = vld.sshfl [vmem:[#allocation1 + $0x18] sm:$0xff pattern:$0x73625140]
    %vm1267 = vcmask 293888
    %v1268 = vsel %vm1267, %v1247, 0
    %v1270 = vsel %vm1267, %v1251, 0
    %v1272 = vsel %vm1267, %v1257, 0
    %v1275 = vsel %vm196, %v1221, 0
    %v1278 = vsel %vm196, %v1222, 0
    %1280 = vmatpush.msra.mxu0 %v1147
    %1281 = vmatpush.msra.mxu0 %v1145
    %1282 = vmatpush.msra.mxu0 %v1143
    %1283 = vmatpush.msra.mxu0 %v1141
    %1284 = vmatpush.msra.mxu0 %v1139
    %1285 = vmatpush.msra.mxu0 %v1137
    %1286 = vmatpush.msra.mxu0 %v1135
    %1287 = vmatpush.msra.mxu0 %v1133
    %1288 = vmatpush.msra.mxu0 %v1131
    %1289 = vmatpush.msra.mxu0 %v1129
    %1290 = vmatpush.msra.mxu0 %v1127
    %1291 = vmatpush.msra.mxu0 %v1125
    %1292 = vmatpush.msra.mxu0 %v1123
    %1293 = vmatpush.msra.mxu0 %v1121
    %1294 = vmatpush.msra.mxu0 %v1119
    %1295 = vmatpush.msra.mxu0 %v1117
    %1296 = vmatmul.f32.gmra.mxu0 %v1244
    %v1297 = vpop.f32.mrf.mxu0
    %v1298 = vadd.f32 %v1225, %v1297
    %1299 = vmatmul.f32.gmra.mxu0 %v1248
    %v1300 = vpop.f32.mrf.mxu0
    %v1301 = vadd.f32 %v1225, %v1300
    %1302 = vmatmul.f32.gmra.mxu0 %v1254
    %v1303 = vpop.f32.mrf.mxu0
    %v1304 = vadd.f32 %v1225, %v1303
    %1305 = vdwg.mxu0
    %1306 = vmatpush.msra.mxu0 %v1179
    %1307 = vmatpush.msra.mxu0 %v1177
    %1308 = vmatpush.msra.mxu0 %v1175
    %1309 = vmatpush.msra.mxu0 %v1173
    %1310 = vmatpush.msra.mxu0 %v1171
    %1311 = vmatpush.msra.mxu0 %v1169
    %1312 = vmatpush.msra.mxu0 %v1167
    %1313 = vmatpush.msra.mxu0 %v1165
    %1314 = vmatpush.msra.mxu0 %v1163
    %1315 = vmatpush.msra.mxu0 %v1161
    %1316 = vmatpush.msra.mxu0 %v1159
    %1317 = vmatpush.msra.mxu0 %v1157
    %1318 = vmatpush.msra.mxu0 %v1155
    %1319 = vmatpush.msra.mxu0 %v1153
    %1320 = vmatpush.msra.mxu0 %v1151
    %1321 = vmatpush.msra.mxu0 %v1149
    %1322 = vmatmul.f32.gmra.mxu0 %v1245
    %v1323 = vpop.f32.mrf.mxu0
    %v1324 = vadd.f32 %v1298, %v1323
    %1325 = vmatmul.f32.gmra.mxu0 %v1249
    %v1326 = vpop.f32.mrf.mxu0
    %v1327 = vadd.f32 %v1301, %v1326
    %1328 = vmatmul.f32.gmra.mxu0 %v1255
    %v1329 = vpop.f32.mrf.mxu0
    %v1330 = vadd.f32 %v1304, %v1329
    %1331 = vdwg.mxu0
    %1332 = vmatpush.msra.mxu0 %v1211
    %1333 = vmatpush.msra.mxu0 %v1209
    %1334 = vmatpush.msra.mxu0 %v1207
    %1335 = vmatpush.msra.mxu0 %v1205
    %1336 = vmatpush.msra.mxu0 %v1203
    %1337 = vmatpush.msra.mxu0 %v1201
    %1338 = vmatpush.msra.mxu0 %v1199
    %1339 = vmatpush.msra.mxu0 %v1197
    %1340 = vmatpush.msra.mxu0 %v1195
    %1341 = vmatpush.msra.mxu0 %v1193
    %1342 = vmatpush.msra.mxu0 %v1191
    %1343 = vmatpush.msra.mxu0 %v1189
    %1344 = vmatpush.msra.mxu0 %v1187
    %1345 = vmatpush.msra.mxu0 %v1185
    %1346 = vmatpush.msra.mxu0 %v1183
    %1347 = vmatpush.msra.mxu0 %v1181
    %1348 = vmatmul.f32.gmra.mxu0 %v1246
    %v1349 = vpop.f32.mrf.mxu0
    %v1350 = vadd.f32 %v1324, %v1349
    %1351 = vmatmul.f32.gmra.mxu0 %v1250
    %v1352 = vpop.f32.mrf.mxu0
    %v1353 = vadd.f32 %v1327, %v1352
    %1354 = vmatmul.f32.gmra.mxu0 %v1256
    %v1355 = vpop.f32.mrf.mxu0
    %v1356 = vadd.f32 %v1330, %v1355
    %1357 = vdwg.mxu0
    %1358 = vmatpush.msra.mxu0 0.0
    %1359 = vmatpush.msra.mxu0 0.0
    %1360 = vmatpush.msra.mxu0 0.0
    %1361 = vmatpush.msra.mxu0 0.0
    %1362 = vmatpush.msra.mxu0 0.0
    %1363 = vmatpush.msra.mxu0 0.0
    %1364 = vmatpush.msra.mxu0 0.0
    %1365 = vmatpush.msra.mxu0 0.0
    %1366 = vmatpush.msra.mxu0 0.0
    %1367 = vmatpush.msra.mxu0 0.0
    %1368 = vmatpush.msra.mxu0 0.0
    %1369 = vmatpush.msra.mxu0 %v1275
    %1370 = vmatpush.msra.mxu0 %v1219
    %1371 = vmatpush.msra.mxu0 %v1217
    %1372 = vmatpush.msra.mxu0 %v1215
    %1373 = vmatpush.msra.mxu0 %v1213
    %1374 = vmatmul.f32.gmra.mxu0 %v1268
    %v1375 = vpop.f32.mrf.mxu0
    %v1376 = vadd.f32 %v1350, %v1375
    %1377 = vmatmul.f32.gmra.mxu0 %v1270
    %v1378 = vpop.f32.mrf.mxu0
    %v1379 = vadd.f32 %v1353, %v1378
    %1380 = vmatmul.f32.gmra.mxu0 %v1272
    %v1381 = vpop.f32.mrf.mxu0
    %v1382 = vadd.f32 %v1356, %v1381
    %1383 = vdwg.mxu0
    %1384 = vmatpush.msra.mxu0 %v1148
    %1385 = vmatpush.msra.mxu0 %v1146
    %1386 = vmatpush.msra.mxu0 %v1144
    %1387 = vmatpush.msra.mxu0 %v1142
    %1388 = vmatpush.msra.mxu0 %v1140
    %1389 = vmatpush.msra.mxu0 %v1138
    %1390 = vmatpush.msra.mxu0 %v1136
    %1391 = vmatpush.msra.mxu0 %v1134
    %1392 = vmatpush.msra.mxu0 %v1132
    %1393 = vmatpush.msra.mxu0 %v1130
    %1394 = vmatpush.msra.mxu0 %v1128
    %1395 = vmatpush.msra.mxu0 %v1126
    %1396 = vmatpush.msra.mxu0 %v1124
    %1397 = vmatpush.msra.mxu0 %v1122
    %1398 = vmatpush.msra.mxu0 %v1120
    %1399 = vmatpush.msra.mxu0 %v1118
    %1400 = vmatmul.f32.gmra.mxu0 %v1244
    %v1401 = vpop.f32.mrf.mxu0
    %v1402 = vadd.f32 %v1226, %v1401
    %1403 = vmatmul.f32.gmra.mxu0 %v1248
    %v1404 = vpop.f32.mrf.mxu0
    %v1405 = vadd.f32 %v1226, %v1404
    %1406 = vmatmul.f32.gmra.mxu0 %v1254
    %v1407 = vpop.f32.mrf.mxu0
    %v1408 = vadd.f32 %v1226, %v1407
    %1409 = vdwg.mxu0
    %1410 = vmatpush.msra.mxu0 %v1180
    %1411 = vmatpush.msra.mxu0 %v1178
    %1412 = vmatpush.msra.mxu0 %v1176
    %1413 = vmatpush.msra.mxu0 %v1174
    %1414 = vmatpush.msra.mxu0 %v1172
    %1415 = vmatpush.msra.mxu0 %v1170
    %1416 = vmatpush.msra.mxu0 %v1168
    %1417 = vmatpush.msra.mxu0 %v1166
    %1418 = vmatpush.msra.mxu0 %v1164
    %1419 = vmatpush.msra.mxu0 %v1162
    %1420 = vmatpush.msra.mxu0 %v1160
    %1421 = vmatpush.msra.mxu0 %v1158
    %1422 = vmatpush.msra.mxu0 %v1156
    %1423 = vmatpush.msra.mxu0 %v1154
    %1424 = vmatpush.msra.mxu0 %v1152
    %1425 = vmatpush.msra.mxu0 %v1150
    %1426 = vmatmul.f32.gmra.mxu0 %v1245
    %v1427 = vpop.f32.mrf.mxu0
    %v1428 = vadd.f32 %v1402, %v1427
    %1429 = vmatmul.f32.gmra.mxu0 %v1249
    %v1430 = vpop.f32.mrf.mxu0
    %v1431 = vadd.f32 %v1405, %v1430
    %1432 = vmatmul.f32.gmra.mxu0 %v1255
    %v1433 = vpop.f32.mrf.mxu0
    %v1434 = vadd.f32 %v1408, %v1433
    %1435 = vdwg.mxu0
    %1436 = vmatpush.msra.mxu0 %v1212
    %1437 = vmatpush.msra.mxu0 %v1210
    %1438 = vmatpush.msra.mxu0 %v1208
    %1439 = vmatpush.msra.mxu0 %v1206
    %1440 = vmatpush.msra.mxu0 %v1204
    %1441 = vmatpush.msra.mxu0 %v1202
    %1442 = vmatpush.msra.mxu0 %v1200
    %1443 = vmatpush.msra.mxu0 %v1198
    %1444 = vmatpush.msra.mxu0 %v1196
    %1445 = vmatpush.msra.mxu0 %v1194
    %1446 = vmatpush.msra.mxu0 %v1192
    %1447 = vmatpush.msra.mxu0 %v1190
    %1448 = vmatpush.msra.mxu0 %v1188
    %1449 = vmatpush.msra.mxu0 %v1186
    %1450 = vmatpush.msra.mxu0 %v1184
    %1451 = vmatpush.msra.mxu0 %v1182
    %1452 = vmatmul.f32.gmra.mxu0 %v1246
    %v1453 = vpop.f32.mrf.mxu0
    %v1454 = vadd.f32 %v1428, %v1453
    %1455 = vmatmul.f32.gmra.mxu0 %v1250
    %v1456 = vpop.f32.mrf.mxu0
    %v1457 = vadd.f32 %v1431, %v1456
    %1458 = vmatmul.f32.gmra.mxu0 %v1256
    %v1459 = vpop.f32.mrf.mxu0
    %v1460 = vadd.f32 %v1434, %v1459
    %1461 = vdwg.mxu0
    %1462 = vmatpush.msra.mxu0 0.0
    %1463 = vmatpush.msra.mxu0 0.0
    %1464 = vmatpush.msra.mxu0 0.0
    %1465 = vmatpush.msra.mxu0 0.0
    %1466 = vmatpush.msra.mxu0 0.0
    %1467 = vmatpush.msra.mxu0 0.0
    %1468 = vmatpush.msra.mxu0 0.0
    %1469 = vmatpush.msra.mxu0 0.0
    %1470 = vmatpush.msra.mxu0 0.0
    %1471 = vmatpush.msra.mxu0 0.0
    %1472 = vmatpush.msra.mxu0 0.0
    %1473 = vmatpush.msra.mxu0 %v1278
    %1474 = vmatpush.msra.mxu0 %v1220
    %1475 = vmatpush.msra.mxu0 %v1218
    %1476 = vmatpush.msra.mxu0 %v1216
    %1477 = vmatpush.msra.mxu0 %v1214
    %1478 = vmatmul.f32.gmra.mxu0 %v1268
    %v1479 = vpop.f32.mrf.mxu0
    %v1480 = vadd.f32 %v1454, %v1479
    %1481 = vmatmul.f32.gmra.mxu0 %v1270
    %v1482 = vpop.f32.mrf.mxu0
    %v1483 = vadd.f32 %v1457, %v1482
    %1484 = vmatmul.f32.gmra.mxu0 %v1272
    %v1485 = vpop.f32.mrf.mxu0
    %v1486 = vadd.f32 %v1460, %v1485
    %1487 = vdwg.mxu0
    %v1488 = vmax.f32 %v1376, 0.0
    %v1489 = vmax.f32 %v1480, 0.0
    %v1490 = vmax.f32 %v1379, 0.0
    %v1491 = vmax.f32 %v1483, 0.0
    %v1492 = vmax.f32 %v1382, 0.0
    %v1493 = vmax.f32 %v1486, 0.0
    %v1494 = vld [vmem:[%s9] sm:$0xff]
    %v1495 = vld [vmem:[%s9 + $0x8] sm:$0xff]
    %v1496 = vld [vmem:[%s9 + $0x10] sm:$0xff]
    %v1497 = vld [vmem:[%s9 + $0x18] sm:$0xff]
    %v1498 = vld [vmem:[%s9 + $0x20] sm:$0xff]
    %v1499 = vld [vmem:[%s9 + $0x28] sm:$0xff]
    %v1500 = vld [vmem:[%s9 + $0x30] sm:$0xff]
    %v1501 = vld [vmem:[%s9 + $0x38] sm:$0xff]
    %v1502 = vld [vmem:[%s9 + $0x40] sm:$0xff]
    %v1503 = vld [vmem:[%s9 + $0x48] sm:$0xff]
    %v1504 = vld [vmem:[%s9 + $0x50] sm:$0xff]
    %v1505 = vld [vmem:[%s9 + $0x58] sm:$0xff]
    %v1506 = vld [vmem:[%s9 + $0x60] sm:$0xff]
    %v1507 = vld [vmem:[%s9 + $0x68] sm:$0xff]
    %v1508 = vld [vmem:[%s9 + $0x70] sm:$0xff]
    %v1509 = vld [vmem:[%s9 + $0x78] sm:$0xff]
    %v1510 = vld [vmem:[%s9 + $0x80] sm:$0xff]
    %v1511 = vld [vmem:[%s9 + $0x88] sm:$0xff]
    %v1512 = vld [vmem:[%s9 + $0x90] sm:$0xff]
    %v1513 = vld [vmem:[%s9 + $0x98] sm:$0xff]
    %v1515 = vsel %vm211, %v1489, 0
    %v1518 = vsel %vm211, %v1491, 0
    %v1521 = vsel %vm211, %v1493, 0
    %1523 = vmatpush.msra.mxu0 %v1509
    %1524 = vmatpush.msra.mxu0 %v1508
    %1525 = vmatpush.msra.mxu0 %v1507
    %1526 = vmatpush.msra.mxu0 %v1506
    %1527 = vmatpush.msra.mxu0 %v1505
    %1528 = vmatpush.msra.mxu0 %v1504
    %1529 = vmatpush.msra.mxu0 %v1503
    %1530 = vmatpush.msra.mxu0 %v1502
    %1531 = vmatpush.msra.mxu0 %v1501
    %1532 = vmatpush.msra.mxu0 %v1500
    %1533 = vmatpush.msra.mxu0 %v1499
    %1534 = vmatpush.msra.mxu0 %v1498
    %1535 = vmatpush.msra.mxu0 %v1497
    %1536 = vmatpush.msra.mxu0 %v1496
    %1537 = vmatpush.msra.mxu0 %v1495
    %1538 = vmatpush.msra.mxu0 %v1494
    %1539 = vmatmul.f32.gmra.mxu0 %v1488
    %v1540 = vpop.f32.mrf.mxu0
    %v1541 = vadd.f32 0.0, %v1540
    %1542 = vmatmul.f32.gmra.mxu0 %v1490
    %v1543 = vpop.f32.mrf.mxu0
    %v1544 = vadd.f32 0.0, %v1543
    %1545 = vmatmul.f32.gmra.mxu0 %v1492
    %v1546 = vpop.f32.mrf.mxu0
    %v1547 = vadd.f32 0.0, %v1546
    %1548 = vdwg.mxu0
    %1549 = vmatpush.msra.mxu0 0.0
    %1550 = vmatpush.msra.mxu0 0.0
    %1551 = vmatpush.msra.mxu0 0.0
    %1552 = vmatpush.msra.mxu0 0.0
    %1553 = vmatpush.msra.mxu0 0.0
    %1554 = vmatpush.msra.mxu0 0.0
    %1555 = vmatpush.msra.mxu0 0.0
    %1556 = vmatpush.msra.mxu0 0.0
    %1557 = vmatpush.msra.mxu0 0.0
    %1558 = vmatpush.msra.mxu0 0.0
    %1559 = vmatpush.msra.mxu0 0.0
    %1560 = vmatpush.msra.mxu0 0.0
    %1561 = vmatpush.msra.mxu0 %v1513
    %1562 = vmatpush.msra.mxu0 %v1512
    %1563 = vmatpush.msra.mxu0 %v1511
    %1564 = vmatpush.msra.mxu0 %v1510
    %1565 = vmatmul.f32.gmra.mxu0 %v1515
    %v1566 = vpop.f32.mrf.mxu0
    %v1567 = vadd.f32 %v1541, %v1566
    %1568 = vmatmul.f32.gmra.mxu0 %v1518
    %v1569 = vpop.f32.mrf.mxu0
    %v1570 = vadd.f32 %v1544, %v1569
    %1571 = vmatmul.f32.gmra.mxu0 %v1521
    %v1572 = vpop.f32.mrf.mxu0
    %v1573 = vadd.f32 %v1547, %v1572
    %1574 = vdwg.mxu0
    %v1575 = vld [vmem:[%s10] sm:$0xff]
    %v1576 = vld [vmem:[%s10 + $0x8] sm:$0xff]
    %v1577 = vld [vmem:[%s10 + $0x10] sm:$0xff]
    %v1578 = vld [vmem:[%s10 + $0x18] sm:$0xff]
    %v1579 = vld [vmem:[%s10 + $0x20] sm:$0xff]
    %v1580 = vld [vmem:[%s10 + $0x28] sm:$0xff]
    %v1581 = vld [vmem:[%s10 + $0x30] sm:$0xff]
    %v1582 = vld [vmem:[%s10 + $0x38] sm:$0xff]
    %v1583 = vld [vmem:[%s10 + $0x40] sm:$0xff]
    %v1584 = vld [vmem:[%s10 + $0x48] sm:$0xff]
    %v1585 = vld [vmem:[%s10 + $0x50] sm:$0xff]
    %v1586 = vld [vmem:[%s10 + $0x58] sm:$0xff]
    %v1587 = vld [vmem:[%s10 + $0x60] sm:$0xff]
    %v1588 = vld [vmem:[%s10 + $0x68] sm:$0xff]
    %v1589 = vld [vmem:[%s10 + $0x70] sm:$0xff]
    %v1590 = vld [vmem:[%s10 + $0x78] sm:$0xff]
    %v1591 = vld [vmem:[%s10 + $0x80] sm:$0xff]
    %v1592 = vld [vmem:[%s10 + $0x88] sm:$0xff]
    %v1593 = vld [vmem:[%s10 + $0x90] sm:$0xff]
    %v1594 = vld [vmem:[%s10 + $0x98] sm:$0xff]
    %1595 = vmatpush.msra.mxu0 %v1590
    %1596 = vmatpush.msra.mxu0 %v1589
    %1597 = vmatpush.msra.mxu0 %v1588
    %1598 = vmatpush.msra.mxu0 %v1587
    %1599 = vmatpush.msra.mxu0 %v1586
    %1600 = vmatpush.msra.mxu0 %v1585
    %1601 = vmatpush.msra.mxu0 %v1584
    %1602 = vmatpush.msra.mxu0 %v1583
    %1603 = vmatpush.msra.mxu0 %v1582
    %1604 = vmatpush.msra.mxu0 %v1581
    %1605 = vmatpush.msra.mxu0 %v1580
    %1606 = vmatpush.msra.mxu0 %v1579
    %1607 = vmatpush.msra.mxu0 %v1578
    %1608 = vmatpush.msra.mxu0 %v1577
    %1609 = vmatpush.msra.mxu0 %v1576
    %1610 = vmatpush.msra.mxu0 %v1575
    %1611 = vmatmul.f32.gmra.mxu0 %v1488
    %v1612 = vpop.f32.mrf.mxu0
    %v1613 = vadd.f32 0.0, %v1612
    %1614 = vmatmul.f32.gmra.mxu0 %v1490
    %v1615 = vpop.f32.mrf.mxu0
    %v1616 = vadd.f32 0.0, %v1615
    %1617 = vmatmul.f32.gmra.mxu0 %v1492
    %v1618 = vpop.f32.mrf.mxu0
    %v1619 = vadd.f32 0.0, %v1618
    %1620 = vdwg.mxu0
    %1621 = vmatpush.msra.mxu0 0.0
    %1622 = vmatpush.msra.mxu0 0.0
    %1623 = vmatpush.msra.mxu0 0.0
    %1624 = vmatpush.msra.mxu0 0.0
    %1625 = vmatpush.msra.mxu0 0.0
    %1626 = vmatpush.msra.mxu0 0.0
    %1627 = vmatpush.msra.mxu0 0.0
    %1628 = vmatpush.msra.mxu0 0.0
    %1629 = vmatpush.msra.mxu0 0.0
    %1630 = vmatpush.msra.mxu0 0.0
    %1631 = vmatpush.msra.mxu0 0.0
    %1632 = vmatpush.msra.mxu0 0.0
    %1633 = vmatpush.msra.mxu0 %v1594
    %1634 = vmatpush.msra.mxu0 %v1593
    %1635 = vmatpush.msra.mxu0 %v1592
    %1636 = vmatpush.msra.mxu0 %v1591
    %1637 = vmatmul.f32.gmra.mxu0 %v1515
    %v1638 = vpop.f32.mrf.mxu0
    %v1639 = vadd.f32 %v1613, %v1638
    %1640 = vmatmul.f32.gmra.mxu0 %v1518
    %v1641 = vpop.f32.mrf.mxu0
    %v1642 = vadd.f32 %v1616, %v1641
    %1643 = vmatmul.f32.gmra.mxu0 %v1521
    %v1644 = vpop.f32.mrf.mxu0
    %v1645 = vadd.f32 %v1619, %v1644
    %1646 = vdwg.mxu0
    %v1647 = vmax.f32 %v1567, %v1639
    %v1648 = vmax.f32 %v1570, %v1642
    %v1649 = vmax.f32 %v1573, %v1645
    %v1650 = vld [vmem:[%s11] sm:$0xff]
    %v1651 = vld [vmem:[%s11 + $0x8] sm:$0x3]
    %vm1652 = vcmask 162816
    %v1654 = vsel %vm1652, %v1650, 0
    %v1657 = vsel %vm1652, %v1651, 0
    %v1660 = vsel %vm196, %v1649, 0
    %1662 = vmatpush.msra.mxu0 0.0
    %1663 = vmatpush.msra.mxu0 0.0
    %1664 = vmatpush.msra.mxu0 0.0
    %1665 = vmatpush.msra.mxu0 0.0
    %1666 = vmatpush.msra.mxu0 0.0
    %1667 = vmatpush.msra.mxu0 0.0
    %1668 = vmatpush.msra.mxu0 0.0
    %1669 = vmatpush.msra.mxu0 0.0
    %1670 = vmatpush.msra.mxu0 0.0
    %1671 = vmatpush.msra.mxu0 0.0
    %1672 = vmatpush.msra.mxu0 0.0
    %1673 = vmatpush.msra.mxu0 0.0
    %1674 = vmatpush.msra.mxu0 0.0
    %1675 = vmatpush.msra.mxu0 %v1660
    %1676 = vmatpush.msra.mxu0 %v1648
    %1677 = vmatpush.msra.mxu0 %v1647
    %1678 = vmatmul.f32.gmra.mxu0 %v1654
    %v1679 = vpop.f32.mrf.mxu0
    %v1680 = vadd.f32 0.0, %v1679
    %1681 = vmatmul.f32.gmra.mxu0 %v1657
    %v1682 = vpop.f32.mrf.mxu0
    %v1683 = vadd.f32 0.0, %v1682
    %1684 = vdwg.mxu0
    %v1685 = vld [vmem:[%s12] sm:$0xff]
    %v1686 = vld [vmem:[%s12 + $0x8] sm:$0x3]
    %v1688 = vsel %vm1652, %v1685, 0
    %v1691 = vsel %vm1652, %v1686, 0
    %1693 = vmatpush.msra.mxu0 0.0
    %1694 = vmatpush.msra.mxu0 0.0
    %1695 = vmatpush.msra.mxu0 0.0
    %1696 = vmatpush.msra.mxu0 0.0
    %1697 = vmatpush.msra.mxu0 0.0
    %1698 = vmatpush.msra.mxu0 0.0
    %1699 = vmatpush.msra.mxu0 0.0
    %1700 = vmatpush.msra.mxu0 0.0
    %1701 = vmatpush.msra.mxu0 0.0
    %1702 = vmatpush.msra.mxu0 0.0
    %1703 = vmatpush.msra.mxu0 0.0
    %1704 = vmatpush.msra.mxu0 0.0
    %1705 = vmatpush.msra.mxu0 0.0
    %1706 = vmatpush.msra.mxu0 %v1660
    %1707 = vmatpush.msra.mxu0 %v1648
    %1708 = vmatpush.msra.mxu0 %v1647
    %1709 = vmatmul.f32.gmra.mxu0 %v1688
    %v1710 = vpop.f32.mrf.mxu0
    %v1711 = vadd.f32 0.0, %v1710
    %1712 = vmatmul.f32.gmra.mxu0 %v1691
    %v1713 = vpop.f32.mrf.mxu0
    %v1714 = vadd.f32 0.0, %v1713
    %1715 = vdwg.mxu0
    %v1716 = vmax.f32 %v1680, %v1711
    %v1717 = vmax.f32 %v1683, %v1714
    %v1720 = vrot.slane %v1716, 1
    %v1721 = vrot.slane %v1716, 2
    %v1722 = vrot.slane %v1716, 3
    %v1723 = vrot.slane %v1716, 4
    %v1724 = vrot.slane %v1716, 5
    %v1725 = vrot.slane %v1716, 6
    %v1726 = vrot.slane %v1716, 7
    %v1727 = vrot.slane %v1717, 1
    %1728 = vst [vmem:[#allocation1] ss:$9 sm:$0xff] %v1716
    %s1729 = scalar_lea.vmem [#allocation1], 1
    %1730 = vst [vmem:[%s1729] ss:$9 sm:$0xff] %v1724
    %v1731 = vld [vmem:[#allocation1] sm:$0xff]
    %1733 = vst [vmem:[#allocation1] ss:$9 sm:$0xff] %v1720
    %s1734 = scalar_lea.vmem [#allocation1], 1
    %1735 = vst [vmem:[%s1734] ss:$9 sm:$0xff] %v1725
    %v1736 = vld [vmem:[#allocation1] sm:$0xff]
    %1737 = vrot.lane.b32.xlu0 %v1736, 80
    %v1738 = vpop.permute.xlu0 %1737
    %1740 = vst [vmem:[#allocation1] ss:$9 sm:$0xff] %v1721
    %s1741 = scalar_lea.vmem [#allocation1], 1
    %1742 = vst [vmem:[%s1741] ss:$9 sm:$0xff] %v1726
    %v1743 = vld [vmem:[#allocation1] sm:$0xff]
    %1744 = vrot.lane.b32.xlu0 %v1743, 32
    %v1745 = vpop.permute.xlu0 %1744
    %1747 = vst [vmem:[#allocation1] ss:$9 sm:$0xff] %v1722
    %s1748 = scalar_lea.vmem [#allocation1], 1
    %1749 = vst [vmem:[%s1748] ss:$9 sm:$0xff] %v1717
    %v1750 = vld [vmem:[#allocation1] sm:$0xff]
    %1751 = vrot.lane.b32.xlu0 %v1750, 112
    %v1752 = vpop.permute.xlu0 %1751
    %1754 = vst [vmem:[#allocation1] ss:$9 sm:$0xff] %v1723
    %s1755 = scalar_lea.vmem [#allocation1], 1
    %1756 = vst [vmem:[%s1755] ss:$9 sm:$0xff] %v1727
    %v1757 = vld [vmem:[#allocation1] sm:$0xff]
    %1758 = vrot.lane.b32.xlu0 %v1757, 64
    %v1759 = vpop.permute.xlu0 %1758
    %v1761 = vsel %vm1048, %v1731, %v1738
    %v1762 = vsel %vm211, %v1738, %v1745
    %vm1763 = vcmask 916480
    %v1764 = vsel %vm1763, %v1762, %v1752
    %v1765 = vsel %vm220, %v1752, %v1759
    %v1766 = vld [vmem:[%s13] sm:$0xff]
    %v1767 = vld [vmem:[%s13 + $0x8] sm:$0xff]
    %v1768 = vld [vmem:[%s13 + $0x10] sm:$0xff]
    %v1769 = vld [vmem:[%s13 + $0x18] sm:$0xff]
    %v1770 = vld [vmem:[%s13 + $0x20] sm:$0xff]
    %v1771 = vld [vmem:[%s13 + $0x28] sm:$0xff]
    %v1772 = vld [vmem:[%s13 + $0x30] sm:$0xff]
    %v1773 = vld [vmem:[%s13 + $0x38] sm:$0xff]
    %v1774 = vld [vmem:[%s13 + $0x40] sm:$0xff]
    %v1775 = vld [vmem:[%s13 + $0x48] sm:$0xff]
    %v1776 = vld [vmem:[%s13 + $0x50] sm:$0xff]
    %v1777 = vld [vmem:[%s13 + $0x58] sm:$0xff]
    %v1778 = vld [vmem:[%s13 + $0x60] sm:$0xff]
    %v1779 = vld [vmem:[%s13 + $0x68] sm:$0xff]
    %v1780 = vld [vmem:[%s13 + $0x70] sm:$0xff]
    %v1781 = vld [vmem:[%s13 + $0x78] sm:$0xff]
    %v1782 = vld [vmem:[%s13 + $0x80] sm:$0xff]
    %v1783 = vld [vmem:[%s13 + $0x88] sm:$0xff]
    %v1784 = vld [vmem:[%s13 + $0x90] sm:$0xff]
    %v1785 = vld [vmem:[%s13 + $0x98] sm:$0xff]
    %v1786 = vld [vmem:[%s13 + $0xa0] sm:$0xff]
    %v1787 = vld [vmem:[%s13 + $0xa8] sm:$0xff]
    %v1788 = vld [vmem:[%s13 + $0xb0] sm:$0xff]
    %v1789 = vld [vmem:[%s13 + $0xb8] sm:$0xff]
    %v1790 = vld [vmem:[%s13 + $0xc0] sm:$0xff]
    %v1791 = vld [vmem:[%s13 + $0xc8] sm:$0xff]
    %v1792 = vld [vmem:[%s13 + $0xd0] sm:$0xff]
    %v1793 = vld [vmem:[%s13 + $0xd8] sm:$0xff]
    %v1794 = vld [vmem:[%s13 + $0xe0] sm:$0xff]
    %v1795 = vld [vmem:[%s13 + $0xe8] sm:$0xff]
    %v1796 = vld [vmem:[%s13 + $0xf0] sm:$0xff]
    %v1797 = vld [vmem:[%s13 + $0xf8] sm:$0xff]
    %v1798 = vld [vmem:[%s13 + $0x100] sm:$0xff]
    %v1799 = vld [vmem:[%s13 + $0x108] sm:$0xff]
    %v1800 = vld [vmem:[%s13 + $0x110] sm:$0xff]
    %v1801 = vld [vmem:[%s13 + $0x118] sm:$0xff]
    %v1802 = vld [vmem:[%s13 + $0x120] sm:$0xff]
    %v1803 = vld [vmem:[%s13 + $0x128] sm:$0xff]
    %v1804 = vld [vmem:[%s13 + $0x130] sm:$0xff]
    %v1805 = vld [vmem:[%s13 + $0x138] sm:$0xff]
    %v1806 = vld [vmem:[%s13 + $0x140] sm:$0xff]
    %v1807 = vld [vmem:[%s13 + $0x148] sm:$0xff]
    %v1808 = vld [vmem:[%s13 + $0x150] sm:$0xff]
    %v1809 = vld [vmem:[%s13 + $0x158] sm:$0xff]
    %v1810 = vld [vmem:[%s13 + $0x160] sm:$0xff]
    %v1811 = vld [vmem:[%s13 + $0x168] sm:$0xff]
    %v1812 = vld [vmem:[%s13 + $0x170] sm:$0xff]
    %v1813 = vld [vmem:[%s13 + $0x178] sm:$0xff]
    %v1814 = vld [vmem:[%s13 + $0x180] sm:$0xff]
    %v1815 = vld [vmem:[%s13 + $0x188] sm:$0xff]
    %v1816 = vld [vmem:[%s14] sm:$0x1]
    %v1818 = vperm.slane %v1816, 0
    %vm1820 = vcmask 130048
    %v1821 = vsel %vm1820, %v1759, 0
    %1823 = vmatpush.msra.mxu0 %v1781
    %1824 = vmatpush.msra.mxu0 %v1780
    %1825 = vmatpush.msra.mxu0 %v1779
    %1826 = vmatpush.msra.mxu0 %v1778
    %1827 = vmatpush.msra.mxu0 %v1777
    %1828 = vmatpush.msra.mxu0 %v1776
    %1829 = vmatpush.msra.mxu0 %v1775
    %1830 = vmatpush.msra.mxu0 %v1774
    %1831 = vmatpush.msra.mxu0 %v1773
    %1832 = vmatpush.msra.mxu0 %v1772
    %1833 = vmatpush.msra.mxu0 %v1771
    %1834 = vmatpush.msra.mxu0 %v1770
    %1835 = vmatpush.msra.mxu0 %v1769
    %1836 = vmatpush.msra.mxu0 %v1768
    %1837 = vmatpush.msra.mxu0 %v1767
    %1838 = vmatpush.msra.mxu0 %v1766
    %1839 = vmatmul.f32.gmra.mxu0 %v1761
    %v1840 = vpop.f32.mrf.mxu0
    %v1841 = vadd.f32 %v1818, %v1840
    %1842 = vdwg.mxu0
    %1843 = vmatpush.msra.mxu0 %v1797
    %1844 = vmatpush.msra.mxu0 %v1796
    %1845 = vmatpush.msra.mxu0 %v1795
    %1846 = vmatpush.msra.mxu0 %v1794
    %1847 = vmatpush.msra.mxu0 %v1793
    %1848 = vmatpush.msra.mxu0 %v1792
    %1849 = vmatpush.msra.mxu0 %v1791
    %1850 = vmatpush.msra.mxu0 %v1790
    %1851 = vmatpush.msra.mxu0 %v1789
    %1852 = vmatpush.msra.mxu0 %v1788
    %1853 = vmatpush.msra.mxu0 %v1787
    %1854 = vmatpush.msra.mxu0 %v1786
    %1855 = vmatpush.msra.mxu0 %v1785
    %1856 = vmatpush.msra.mxu0 %v1784
    %1857 = vmatpush.msra.mxu0 %v1783
    %1858 = vmatpush.msra.mxu0 %v1782
    %1859 = vmatmul.f32.gmra.mxu0 %v1764
    %v1860 = vpop.f32.mrf.mxu0
    %v1861 = vadd.f32 %v1841, %v1860
    %1862 = vdwg.mxu0
    %1863 = vmatpush.msra.mxu0 %v1813
    %1864 = vmatpush.msra.mxu0 %v1812
    %1865 = vmatpush.msra.mxu0 %v1811
    %1866 = vmatpush.msra.mxu0 %v1810
    %1867 = vmatpush.msra.mxu0 %v1809
    %1868 = vmatpush.msra.mxu0 %v1808
    %1869 = vmatpush.msra.mxu0 %v1807
    %1870 = vmatpush.msra.mxu0 %v1806
    %1871 = vmatpush.msra.mxu0 %v1805
    %1872 = vmatpush.msra.mxu0 %v1804
    %1873 = vmatpush.msra.mxu0 %v1803
    %1874 = vmatpush.msra.mxu0 %v1802
    %1875 = vmatpush.msra.mxu0 %v1801
    %1876 = vmatpush.msra.mxu0 %v1800
    %1877 = vmatpush.msra.mxu0 %v1799
    %1878 = vmatpush.msra.mxu0 %v1798
    %1879 = vmatmul.f32.gmra.mxu0 %v1765
    %v1880 = vpop.f32.mrf.mxu0
    %v1881 = vadd.f32 %v1861, %v1880
    %1882 = vdwg.mxu0
    %1883 = vmatpush.msra.mxu0 0.0
    %1884 = vmatpush.msra.mxu0 0.0
    %1885 = vmatpush.msra.mxu0 0.0
    %1886 = vmatpush.msra.mxu0 0.0
    %1887 = vmatpush.msra.mxu0 0.0
    %1888 = vmatpush.msra.mxu0 0.0
    %1889 = vmatpush.msra.mxu0 0.0
    %1890 = vmatpush.msra.mxu0 0.0
    %1891 = vmatpush.msra.mxu0 0.0
    %1892 = vmatpush.msra.mxu0 0.0
    %1893 = vmatpush.msra.mxu0 0.0
    %1894 = vmatpush.msra.mxu0 0.0
    %1895 = vmatpush.msra.mxu0 0.0
    %1896 = vmatpush.msra.mxu0 0.0
    %1897 = vmatpush.msra.mxu0 %v1815
    %1898 = vmatpush.msra.mxu0 %v1814
    %1899 = vmatmul.f32.gmra.mxu0 %v1821
    %v1900 = vpop.f32.mrf.mxu0
    %v1901 = vadd.f32 %v1881, %v1900
    %1902 = vdwg.mxu0
    %v1903 = vmax.f32 %v1901, 0.0
    %v1904 = vld [vmem:[%s15] sm:$0xff]
    %v1905 = vld [vmem:[%s15 + $0x8] sm:$0xff]
    %v1906 = vld [vmem:[%s15 + $0x10] sm:$0xff]
    %v1907 = vld [vmem:[%s15 + $0x18] sm:$0xff]
    %v1908 = vld [vmem:[%s15 + $0x20] sm:$0xff]
    %v1909 = vld [vmem:[%s15 + $0x28] sm:$0xff]
    %v1910 = vld [vmem:[%s15 + $0x30] sm:$0xff]
    %v1911 = vld [vmem:[%s15 + $0x38] sm:$0xff]
    %v1912 = vld [vmem:[%s15 + $0x40] sm:$0xff]
    %v1913 = vld [vmem:[%s15 + $0x48] sm:$0xff]
    %v1914 = vld [vmem:[%s15 + $0x50] sm:$0xff]
    %v1915 = vld [vmem:[%s15 + $0x58] sm:$0xff]
    %v1916 = vld [vmem:[%s15 + $0x60] sm:$0xff]
    %v1917 = vld [vmem:[%s15 + $0x68] sm:$0xff]
    %v1918 = vld [vmem:[%s15 + $0x70] sm:$0xff]
    %v1919 = vld [vmem:[%s15 + $0x78] sm:$0xff]
    %v1920 = vld [vmem:[%s16] sm:$0x1]
    %v1922 = vperm.slane %v1920, 0
    %1924 = vmatpush.msra.mxu0 %v1919
    %1925 = vmatpush.msra.mxu0 %v1918
    %1926 = vmatpush.msra.mxu0 %v1917
    %1927 = vmatpush.msra.mxu0 %v1916
    %1928 = vmatpush.msra.mxu0 %v1915
    %1929 = vmatpush.msra.mxu0 %v1914
    %1930 = vmatpush.msra.mxu0 %v1913
    %1931 = vmatpush.msra.mxu0 %v1912
    %1932 = vmatpush.msra.mxu0 %v1911
    %1933 = vmatpush.msra.mxu0 %v1910
    %1934 = vmatpush.msra.mxu0 %v1909
    %1935 = vmatpush.msra.mxu0 %v1908
    %1936 = vmatpush.msra.mxu0 %v1907
    %1937 = vmatpush.msra.mxu0 %v1906
    %1938 = vmatpush.msra.mxu0 %v1905
    %1939 = vmatpush.msra.mxu0 %v1904
    %1940 = vmatmul.f32.gmra.mxu0 %v1903
    %v1941 = vpop.f32.mrf.mxu0
    %v1942 = vadd.f32 %v1922, %v1941
    %1943 = vdwg.mxu0
    %v1944 = vmax.f32 %v1942, 0.0
    %v1945 = vld [vmem:[%s17] sm:$0xff]
    %v1946 = vld [vmem:[%s17 + $0x8] sm:$0xff]
    %v1947 = vld [vmem:[%s17 + $0x10] sm:$0xff]
    %v1948 = vld [vmem:[%s17 + $0x18] sm:$0xff]
    %v1949 = vld [vmem:[%s17 + $0x20] sm:$0xff]
    %v1950 = vld [vmem:[%s17 + $0x28] sm:$0xff]
    %v1951 = vld [vmem:[%s17 + $0x30] sm:$0xff]
    %v1952 = vld [vmem:[%s17 + $0x38] sm:$0xff]
    %v1953 = vld [vmem:[%s17 + $0x40] sm:$0xff]
    %v1954 = vld [vmem:[%s17 + $0x48] sm:$0xff]
    %v1955 = vld [vmem:[%s17 + $0x50] sm:$0xff]
    %v1956 = vld [vmem:[%s17 + $0x58] sm:$0xff]
    %v1957 = vld [vmem:[%s17 + $0x60] sm:$0xff]
    %v1958 = vld [vmem:[%s17 + $0x68] sm:$0xff]
    %v1959 = vld [vmem:[%s17 + $0x70] sm:$0xff]
    %v1960 = vld [vmem:[%s17 + $0x78] sm:$0xff]
    %v1961 = vld [vmem:[%s18] sm:$0x1]
    %v1963 = vperm.slane %v1961, 0
    %1965 = vmatpush.msra.mxu0 %v1960
    %1966 = vmatpush.msra.mxu0 %v1959
    %1967 = vmatpush.msra.mxu0 %v1958
    %1968 = vmatpush.msra.mxu0 %v1957
    %1969 = vmatpush.msra.mxu0 %v1956
    %1970 = vmatpush.msra.mxu0 %v1955
    %1971 = vmatpush.msra.mxu0 %v1954
    %1972 = vmatpush.msra.mxu0 %v1953
    %1973 = vmatpush.msra.mxu0 %v1952
    %1974 = vmatpush.msra.mxu0 %v1951
    %1975 = vmatpush.msra.mxu0 %v1950
    %1976 = vmatpush.msra.mxu0 %v1949
    %1977 = vmatpush.msra.mxu0 %v1948
    %1978 = vmatpush.msra.mxu0 %v1947
    %1979 = vmatpush.msra.mxu0 %v1946
    %1980 = vmatpush.msra.mxu0 %v1945
    %1981 = vmatmul.f32.gmra.mxu0 %v1944
    %v1982 = vpop.f32.mrf.mxu0
    %v1983 = vadd.f32 %v1963, %v1982
    %1984 = vdwg.mxu0
    %v1985 = vlaneseq
    %v1986 = vand.u32 %v1985, 127
    %vm1987 = vcmp.lt.s32.totalorder %v1986, 10
    %v1988 = vsel %vm1987, %v1983, -1e+30
    %v1989 = vsel %vm1077, %v1988, -inf
    %1990 = vmax.xlane.f32.xlu0 %v1989
    %v1991 = vpop.xlane.xlu0 %1990
    %v1992 = vsub.f32 %v1988, %v1991
    %v1993 = vmul.f32 %v1992, 1.442695
    %v1994 = vpow.pop %v1993
    %v1995 = vsel %vm1077, %v1994, 0.0
    %1996 = vadd.xlane.f32.xlu0 %v1995
    %v1997 = vpop.xlane.xlu0 %1996
    %v1998 = vlog2.pop %v1997
    %v1999 = vmul.f32 %v1998, 0.6931472
    %v2000 = vsub.f32 %v1992, %v1999
    %2001 = vst [vmem:[#allocation2] sm:$0x3] %v2000
    // Predicated region
    $region78: #{lenet_forward.1} parent=1 // pred_check
      _
    $region79: #{lenet_forward.1} parent=1 // pred_check_branch
      %2003 = sbr.rel (0) target = $region81
    $region80: #{lenet_forward.1} parent=1 // pred_region
      %2005 = vsyncadd [#allocation3], 0
      %s2007 = sshll.u32 [#allocation2], 4
      %s2008 = int_to_ptr.vmem [resolvable:$true] %s2007
      %s2009 = sshll.u32 %s19, 4
      %s2010 = int_to_ptr.hbm [resolvable:$true] %s2009
      %2012 = dma.vmem_to_hbm [thread:$0]  %s2008, 32, %s2010, [#allocation3]
    $region81: #{lenet_forward.1} parent=1 // pred_fallthru
      _
    // Predicated region
    $region82: #{lenet_forward.1} parent=1 // pred_check
      _
    $region83: #{lenet_forward.1} parent=1 // pred_check_branch
      %2014 = sbr.rel (0) target = $region85
    $region84: #{lenet_forward.1} parent=1 // pred_region
      %2016 = dma.done [#allocation3], 32
    $region85: #{lenet_forward.1} parent=1 // pred_fallthru
      _
    %2017 = vsyncpa [#allocation3], 1

</llo_original>
